<compile_context>
chip_gen: v5e
topology: v5e:2x2
jax: 0.10.0
libtpu: 0.0.40
codegen_flags: <defaults>
</compile_context>

<pallas_src>
import functools

import jax
import jax.numpy as jnp
from jax.experimental import pallas as pl
from jax.experimental.pallas import tpu as pltpu

MSA_DIM = 32
PAIR_DIM = 32
NUM_HEADS = 4
HEAD_DIM = PAIR_DIM // NUM_HEADS
NUM_SEQS = 4
LENGTH = 16
BATCH = 2
NEG_MASK_VALUE = -65000.0


# ----------------------------------------------------------------------------
# Fused Pallas kernel: one batch element per grid step
# ----------------------------------------------------------------------------
def _msa_pair_attention_kernel(num_seqs, length, num_heads,
                               m_ref, mask_ref,
                               wmh_ref, bmh_ref, woh_ref, bo_ref,
                               out_ref):
    n, l = num_seqs, length
    hd = wmh_ref.shape[2]
    pair_dim = woh_ref.shape[2]

    mf = m_ref[0].astype(jnp.float32)              # (N*L, msa_dim)
    keep = mask_ref[0] > 0.0                       # (L, L) bool, hoisted out of the head loop
    scale = jnp.float32(hd ** -0.5)

    u = jnp.zeros((l, pair_dim), jnp.float32)      # output_proj accumulator

    # Static per-head loop.  q = k = v (single projection per head); per-head
    # weights were pre-split on the host so no lane slicing of activations.
    for h in range(num_heads):
        qf = jnp.dot(mf, wmh_ref[h], preferred_element_type=jnp.float32) + bmh_ref[h]
        q = qf.reshape(n, l, hd)                   # (N, L, hd) — sublane split only

        s = jnp.einsum('nld,nmd->nlm', q, q,
                       preferred_element_type=jnp.float32) * scale      # (N, L, L)
        s = jnp.where(keep[None, :, :], s, NEG_MASK_VALUE)
        s = s - jnp.max(s, axis=-1, keepdims=True)
        p = jnp.exp(s)
        p = p * pl.reciprocal(jnp.sum(p, axis=-1, keepdims=True), approx=True)

        o = jnp.einsum('nlm,nmd->nld', p, q,
                       preferred_element_type=jnp.float32)              # (N, L, hd)
        om = jnp.mean(o, axis=0)                   # (L, hd): mean over num_seqs

        # Fold the head concatenation into output_proj.
        u = u + jnp.dot(om, woh_ref[h], preferred_element_type=jnp.float32)

    u = u + bo_ref[...]                            # (L, pair_dim)

    # z_update[b, i, j, :] == u[i, :] for every j: emit one lane-dense
    # (L, L*pair_dim) slab instead of a narrow masked (L, L, pair_dim) store.
    out_ref[0] = jnp.concatenate([u] * l, axis=-1).astype(out_ref.dtype)


# ----------------------------------------------------------------------------
# Wrapper
# ----------------------------------------------------------------------------
@jax.jit
def msa_pair_attention_forward(m, z, msa_mask, pair_mask, params):
    """Pallas implementation of MSAPairAttention.forward.

    m: (B, num_seqs, L, msa_dim); pair_mask: (B, L, L) (1 = keep, 0 = mask) or None.
    z / msa_mask are unused (as in the PyTorch module)."""
    del z, msa_mask                                # never read by the torch forward
    B, N, L, Dm = m.shape
    P = params['out_w'].shape[0]
    H = NUM_HEADS
    hd = P // H

    # Host-side (free under jit) weight re-layout into per-head slabs.
    wm_h = params['msa_w'].reshape(Dm, H, hd).transpose(1, 0, 2)   # (H, Dm, hd)
    bm_h = params['msa_b'].reshape(H, 1, hd)                       # (H, 1, hd)
    wo_h = params['out_w'].reshape(H, hd, P)                       # (H, hd, P)
    bo = params['out_b'].reshape(1, P)

    m_flat = m.reshape(B, N * L, Dm)
    if pair_mask is None:
        mask = jnp.ones((B, L, L), jnp.float32)
    else:
        mask = pair_mask.astype(jnp.float32)

    kernel = functools.partial(_msa_pair_attention_kernel, N, L, H)
    rep3 = lambda b: (0, 0, 0)

    out = pl.pallas_call(
        kernel,
        out_shape=jax.ShapeDtypeStruct((B, L, L * P), jnp.float32),
        grid=(B,),
        in_specs=[
            pl.BlockSpec((1, N * L, Dm), lambda b: (b, 0, 0)),   # m (flattened seqs)
            pl.BlockSpec((1, L, L), lambda b: (b, 0, 0)),        # pair mask
            pl.BlockSpec((H, Dm, hd), rep3),                     # msa_proj W, per head
            pl.BlockSpec((H, 1, hd), rep3),                      # msa_proj b, per head
            pl.BlockSpec((H, hd, P), rep3),                      # output_proj W, per head
            pl.BlockSpec((1, P), lambda b: (0, 0)),              # output_proj b
        ],
        out_specs=pl.BlockSpec((1, L, L * P), lambda b: (b, 0, 0)),
        compiler_params=pltpu.CompilerParams(dimension_semantics=("parallel",)),
    )(m_flat, mask, wm_h, bm_h, wo_h, bo)

    return out.reshape(B, L, L, P)


# ----------------------------------------------------------------------------
# Deterministic parameter init (PyTorch nn.Linear-style; weights stored (in, out))
# ----------------------------------------------------------------------------
def _init_linear(key, din, dout):
    kw, kb = jax.random.split(key)
    bound = 1.0 / (din ** 0.5)
    w = jax.random.uniform(kw, (din, dout), jnp.float32, -bound, bound)
    b = jax.random.uniform(kb, (dout,), jnp.float32, -bound, bound)
    return w, b


def init_params(key, msa_dim=MSA_DIM, pair_dim=PAIR_DIM):
    k1, k2, k3 = jax.random.split(key, 3)
    msa_w, msa_b = _init_linear(k1, msa_dim, pair_dim)
    pair_w, pair_b = _init_linear(k2, pair_dim, pair_dim)   # defined in the module, unused in forward
    out_w, out_b = _init_linear(k3, pair_dim, pair_dim)
    return {'msa_w': msa_w, 'msa_b': msa_b,
            'pair_w': pair_w, 'pair_b': pair_b,
            'out_w': out_w, 'out_b': out_b}


# ----------------------------------------------------------------------------
# Pure-JAX reference mirroring the PyTorch module (correctness check)
# ----------------------------------------------------------------------------
def _ref_forward(m, z, msa_mask, pair_mask, params):
    B, N, L, Dm = m.shape
    P = params['out_w'].shape[0]
    H, hd = NUM_HEADS, P // NUM_HEADS
    mp = m @ params['msa_w'] + params['msa_b']                 # (B, N, L, P)
    q = mp.reshape(B * N, L, H, hd).transpose(0, 2, 1, 3)      # (BN, H, L, hd); k = v = q
    s = jnp.einsum('bhld,bhmd->bhlm', q, q) / (hd ** 0.5)
    if pair_mask is not None:
        keep = jnp.broadcast_to(pair_mask.astype(bool)[:, None, None, :, :],
                                (B, N, H, L, L)).reshape(B * N, H, L, L)
        s = jnp.where(keep, s, NEG_MASK_VALUE)
    a = jax.nn.softmax(s, axis=-1)
    o = jnp.einsum('bhlm,bhmd->bhld', a, q)
    o = o.transpose(0, 2, 1, 3).reshape(B, N, L, P)
    zu = o.mean(axis=1) @ params['out_w'] + params['out_b']    # (B, L, P)
    return jnp.broadcast_to(zu[:, :, None, :], (B, L, L, P))   # constant over axis 2


# ----------------------------------------------------------------------------
if __name__ == "__main__":
    key = jax.random.PRNGKey(0)
    kp, km, kmask = jax.random.split(key, 3)
    params = init_params(kp)

    B, N, L = BATCH, NUM_SEQS, LENGTH
    m = jax.random.normal(km, (B, N, L, MSA_DIM), jnp.float32)
    z = jnp.zeros((B, L, L, PAIR_DIM), jnp.float32)       # interface-only (unused)
    msa_mask = jnp.ones((B, N, L), jnp.float32)           # interface-only (unused)
    pair_mask = (jax.random.uniform(kmask, (B, L, L)) > 0.3).astype(jnp.float32)
    pair_mask = jnp.maximum(pair_mask, jnp.eye(L, dtype=jnp.float32)[None])

    z_update = msa_pair_attention_forward(m, z, msa_mask, pair_mask, params)
    jax.block_until_ready(z_update)

    with jax.default_matmul_precision("highest"):
        ref = _ref_forward(m, z, msa_mask, pair_mask, params)

    err = float(jnp.max(jnp.abs(z_update - ref)))
    assert z_update.shape == (B, L, L, PAIR_DIM)
    assert err < 1e-2, f"mismatch vs reference: {err}"

    print("KERNEL_OK")
</pallas_src>

<mosaic_0001>
module attributes {stable_mosaic.version = 11 : i64} {
  func.func @_msa_pair_attention_kernel(%arg0: i32, %arg1: memref<1x64x32xf32, #tpu.memory_space<vmem>>, %arg2: memref<1x16x16xf32, #tpu.memory_space<vmem>>, %arg3: memref<4x32x8xf32, #tpu.memory_space<vmem>>, %arg4: memref<4x1x8xf32, #tpu.memory_space<vmem>>, %arg5: memref<4x8x32xf32, #tpu.memory_space<vmem>>, %arg6: memref<1x32xf32, #tpu.memory_space<vmem>>, %arg7: memref<1x16x512xf32, #tpu.memory_space<vmem>>) attributes {dimension_semantics = [#tpu.dimension_semantics<parallel>], iteration_bounds = array<i64: 2>, scalar_prefetch = 0 : i64, scratch_operands = 0 : i64, tpu.core_type = #tpu.core_type<tc>, window_params = [{transform_indices = @transform_0, window_bounds = array<i64: 1, 64, 32>}, {transform_indices = @transform_1, window_bounds = array<i64: 1, 16, 16>}, {pipeline_mode = #tpu.pipeline_mode<synchronous>, transform_indices = @transform_2, window_bounds = array<i64: 4, 32, 8>}, {pipeline_mode = #tpu.pipeline_mode<synchronous>, transform_indices = @transform_3, window_bounds = array<i64: 4, 1, 8>}, {pipeline_mode = #tpu.pipeline_mode<synchronous>, transform_indices = @transform_4, window_bounds = array<i64: 4, 8, 32>}, {pipeline_mode = #tpu.pipeline_mode<synchronous>, transform_indices = @transform_5, window_bounds = array<i64: 1, 32>}, {transform_indices = @transform_6, window_bounds = array<i64: 1, 16, 512>}]} {
    %c0 = arith.constant 0 : index
    %c0_0 = arith.constant 0 : index
    %c0_1 = arith.constant 0 : index
    %0 = vector.load %arg1[%c0, %c0_0, %c0_1] : memref<1x64x32xf32, #tpu.memory_space<vmem>>, vector<1x64x32xf32>
    %1 = vector.shape_cast %0 : vector<1x64x32xf32> to vector<64x32xf32>
    %c0_2 = arith.constant 0 : index
    %c0_3 = arith.constant 0 : index
    %c0_4 = arith.constant 0 : index
    %2 = vector.load %arg2[%c0_2, %c0_3, %c0_4] : memref<1x16x16xf32, #tpu.memory_space<vmem>>, vector<1x16x16xf32>
    %3 = vector.shape_cast %2 : vector<1x16x16xf32> to vector<16x16xf32>
    %cst = arith.constant 0.000000e+00 : f32
    %4 = vector.broadcast %cst : f32 to vector<16x16xf32>
    %5 = arith.cmpf ogt, %3, %4 : vector<16x16xf32>
    %cst_5 = arith.constant 0.000000e+00 : f32
    %6 = vector.broadcast %cst_5 : f32 to vector<16x32xf32>
    %c0_6 = arith.constant 0 : index
    %c0_7 = arith.constant 0 : index
    %c0_8 = arith.constant 0 : index
    %7 = vector.load %arg3[%c0_6, %c0_7, %c0_8] : memref<4x32x8xf32, #tpu.memory_space<vmem>>, vector<1x32x8xf32>
    %8 = vector.shape_cast %7 : vector<1x32x8xf32> to vector<32x8xf32>
    %cst_9 = arith.constant dense<0.000000e+00> : vector<64x8xf32>
    %9 = tpu.matmul %1, %8, %cst_9 {dimension_numbers = #tpu.dot_dimension_numbers<[1], [0], [0], [1], [0, 0, 1, 1], [], []>} : vector<64x32xf32>, vector<32x8xf32>, vector<64x8xf32> -> vector<64x8xf32>
    %c0_10 = arith.constant 0 : index
    %c0_11 = arith.constant 0 : index
    %c0_12 = arith.constant 0 : index
    %10 = vector.load %arg4[%c0_10, %c0_11, %c0_12] : memref<4x1x8xf32, #tpu.memory_space<vmem>>, vector<1x1x8xf32>
    %11 = vector.shape_cast %10 : vector<1x1x8xf32> to vector<1x8xf32>
    %12 = vector.broadcast %11 : vector<1x8xf32> to vector<64x8xf32>
    %13 = arith.addf %9, %12 : vector<64x8xf32>
    %14 = vector.shape_cast %13 : vector<64x8xf32> to vector<4x16x8xf32>
    "tpu.trace_start"() <{level = 10 : i32, message = "nld,nmd->nlm"}> : () -> ()
    %cst_13 = arith.constant dense<0.000000e+00> : vector<4x16x16xf32>
    %15 = tpu.matmul %14, %14, %cst_13 {dimension_numbers = #tpu.dot_dimension_numbers<[2], [2], [1], [1], [0, 0, 0, 1, 1, 1], [0], [0]>} : vector<4x16x8xf32>, vector<4x16x8xf32>, vector<4x16x16xf32> -> vector<4x16x16xf32>
    "tpu.trace_stop"() : () -> ()
    %cst_14 = arith.constant 0.353553385 : f32
    %16 = vector.broadcast %cst_14 : f32 to vector<4x16x16xf32>
    %17 = arith.mulf %15, %16 : vector<4x16x16xf32>
    %18 = vector.shape_cast %5 : vector<16x16xi1> to vector<1x16x16xi1>
    %cst_15 = arith.constant -6.500000e+04 : f32
    %19 = vector.shape_cast %18 : vector<1x16x16xi1> to vector<1x16x16xi1>
    %20 = vector.broadcast %19 : vector<1x16x16xi1> to vector<4x16x16xi1>
    %21 = vector.broadcast %cst_15 : f32 to vector<4x16x16xf32>
    %22 = arith.select %20, %17, %21 : vector<4x16x16xi1>, vector<4x16x16xf32>
    %cst_16 = arith.constant dense<0xFF800000> : vector<4x16xf32>
    %23 = vector.multi_reduction <maximumf>, %22, %cst_16 [2] : vector<4x16x16xf32> to vector<4x16xf32>
    %24 = vector.shape_cast %23 : vector<4x16xf32> to vector<4x16x1xf32>
    %25 = vector.broadcast %24 : vector<4x16x1xf32> to vector<4x16x16xf32>
    %26 = arith.subf %22, %25 : vector<4x16x16xf32>
    %27 = math.exp %26 : vector<4x16x16xf32>
    %cst_17 = arith.constant dense<0.000000e+00> : vector<4x16xf32>
    %28 = vector.multi_reduction <add>, %27, %cst_17 [2] : vector<4x16x16xf32> to vector<4x16xf32>
    %29 = vector.shape_cast %28 : vector<4x16xf32> to vector<4x16x1xf32>
    %30 = tpu.reciprocal %29 {approx = true} : vector<4x16x1xf32> -> vector<4x16x1xf32>
    %31 = vector.broadcast %30 : vector<4x16x1xf32> to vector<4x16x16xf32>
    %32 = arith.mulf %27, %31 : vector<4x16x16xf32>
    "tpu.trace_start"() <{level = 10 : i32, message = "nlm,nmd->nld"}> : () -> ()
    %cst_18 = arith.constant dense<0.000000e+00> : vector<4x16x8xf32>
    %33 = tpu.matmul %32, %14, %cst_18 {dimension_numbers = #tpu.dot_dimension_numbers<[2], [1], [1], [2], [0, 0, 0, 1, 1, 2], [0], [0]>} : vector<4x16x16xf32>, vector<4x16x8xf32>, vector<4x16x8xf32> -> vector<4x16x8xf32>
    "tpu.trace_stop"() : () -> ()
    %cst_19 = arith.constant dense<0.000000e+00> : vector<16x8xf32>
    %34 = vector.multi_reduction <add>, %33, %cst_19 [0] : vector<4x16x8xf32> to vector<16x8xf32>
    %cst_20 = arith.constant 4.000000e+00 : f32
    %35 = vector.broadcast %cst_20 : f32 to vector<16x8xf32>
    %36 = arith.divf %34, %35 : vector<16x8xf32>
    %c0_21 = arith.constant 0 : index
    %c0_22 = arith.constant 0 : index
    %c0_23 = arith.constant 0 : index
    %37 = vector.load %arg5[%c0_21, %c0_22, %c0_23] : memref<4x8x32xf32, #tpu.memory_space<vmem>>, vector<1x8x32xf32>
    %38 = vector.shape_cast %37 : vector<1x8x32xf32> to vector<8x32xf32>
    %cst_24 = arith.constant dense<0.000000e+00> : vector<16x32xf32>
    %39 = tpu.matmul %36, %38, %cst_24 {dimension_numbers = #tpu.dot_dimension_numbers<[1], [0], [0], [1], [0, 0, 1, 1], [], []>} : vector<16x8xf32>, vector<8x32xf32>, vector<16x32xf32> -> vector<16x32xf32>
    %40 = arith.addf %6, %39 : vector<16x32xf32>
    %c1 = arith.constant 1 : index
    %c0_25 = arith.constant 0 : index
    %c0_26 = arith.constant 0 : index
    %41 = vector.load %arg3[%c1, %c0_25, %c0_26] : memref<4x32x8xf32, #tpu.memory_space<vmem>>, vector<1x32x8xf32>
    %42 = vector.shape_cast %41 : vector<1x32x8xf32> to vector<32x8xf32>
    %cst_27 = arith.constant dense<0.000000e+00> : vector<64x8xf32>
    %43 = tpu.matmul %1, %42, %cst_27 {dimension_numbers = #tpu.dot_dimension_numbers<[1], [0], [0], [1], [0, 0, 1, 1], [], []>} : vector<64x32xf32>, vector<32x8xf32>, vector<64x8xf32> -> vector<64x8xf32>
    %c1_28 = arith.constant 1 : index
    %c0_29 = arith.constant 0 : index
    %c0_30 = arith.constant 0 : index
    %44 = vector.load %arg4[%c1_28, %c0_29, %c0_30] : memref<4x1x8xf32, #tpu.memory_space<vmem>>, vector<1x1x8xf32>
    %45 = vector.shape_cast %44 : vector<1x1x8xf32> to vector<1x8xf32>
    %46 = vector.broadcast %45 : vector<1x8xf32> to vector<64x8xf32>
    %47 = arith.addf %43, %46 : vector<64x8xf32>
    %48 = vector.shape_cast %47 : vector<64x8xf32> to vector<4x16x8xf32>
    "tpu.trace_start"() <{level = 10 : i32, message = "nld,nmd->nlm"}> : () -> ()
    %cst_31 = arith.constant dense<0.000000e+00> : vector<4x16x16xf32>
    %49 = tpu.matmul %48, %48, %cst_31 {dimension_numbers = #tpu.dot_dimension_numbers<[2], [2], [1], [1], [0, 0, 0, 1, 1, 1], [0], [0]>} : vector<4x16x8xf32>, vector<4x16x8xf32>, vector<4x16x16xf32> -> vector<4x16x16xf32>
    "tpu.trace_stop"() : () -> ()
    %cst_32 = arith.constant 0.353553385 : f32
    %50 = vector.broadcast %cst_32 : f32 to vector<4x16x16xf32>
    %51 = arith.mulf %49, %50 : vector<4x16x16xf32>
    %52 = vector.shape_cast %5 : vector<16x16xi1> to vector<1x16x16xi1>
    %cst_33 = arith.constant -6.500000e+04 : f32
    %53 = vector.shape_cast %52 : vector<1x16x16xi1> to vector<1x16x16xi1>
    %54 = vector.broadcast %53 : vector<1x16x16xi1> to vector<4x16x16xi1>
    %55 = vector.broadcast %cst_33 : f32 to vector<4x16x16xf32>
    %56 = arith.select %54, %51, %55 : vector<4x16x16xi1>, vector<4x16x16xf32>
    %cst_34 = arith.constant dense<0xFF800000> : vector<4x16xf32>
    %57 = vector.multi_reduction <maximumf>, %56, %cst_34 [2] : vector<4x16x16xf32> to vector<4x16xf32>
    %58 = vector.shape_cast %57 : vector<4x16xf32> to vector<4x16x1xf32>
    %59 = vector.broadcast %58 : vector<4x16x1xf32> to vector<4x16x16xf32>
    %60 = arith.subf %56, %59 : vector<4x16x16xf32>
    %61 = math.exp %60 : vector<4x16x16xf32>
    %cst_35 = arith.constant dense<0.000000e+00> : vector<4x16xf32>
    %62 = vector.multi_reduction <add>, %61, %cst_35 [2] : vector<4x16x16xf32> to vector<4x16xf32>
    %63 = vector.shape_cast %62 : vector<4x16xf32> to vector<4x16x1xf32>
    %64 = tpu.reciprocal %63 {approx = true} : vector<4x16x1xf32> -> vector<4x16x1xf32>
    %65 = vector.broadcast %64 : vector<4x16x1xf32> to vector<4x16x16xf32>
    %66 = arith.mulf %61, %65 : vector<4x16x16xf32>
    "tpu.trace_start"() <{level = 10 : i32, message = "nlm,nmd->nld"}> : () -> ()
    %cst_36 = arith.constant dense<0.000000e+00> : vector<4x16x8xf32>
    %67 = tpu.matmul %66, %48, %cst_36 {dimension_numbers = #tpu.dot_dimension_numbers<[2], [1], [1], [2], [0, 0, 0, 1, 1, 2], [0], [0]>} : vector<4x16x16xf32>, vector<4x16x8xf32>, vector<4x16x8xf32> -> vector<4x16x8xf32>
    "tpu.trace_stop"() : () -> ()
    %cst_37 = arith.constant dense<0.000000e+00> : vector<16x8xf32>
    %68 = vector.multi_reduction <add>, %67, %cst_37 [0] : vector<4x16x8xf32> to vector<16x8xf32>
    %cst_38 = arith.constant 4.000000e+00 : f32
    %69 = vector.broadcast %cst_38 : f32 to vector<16x8xf32>
    %70 = arith.divf %68, %69 : vector<16x8xf32>
    %c1_39 = arith.constant 1 : index
    %c0_40 = arith.constant 0 : index
    %c0_41 = arith.constant 0 : index
    %71 = vector.load %arg5[%c1_39, %c0_40, %c0_41] : memref<4x8x32xf32, #tpu.memory_space<vmem>>, vector<1x8x32xf32>
    %72 = vector.shape_cast %71 : vector<1x8x32xf32> to vector<8x32xf32>
    %cst_42 = arith.constant dense<0.000000e+00> : vector<16x32xf32>
    %73 = tpu.matmul %70, %72, %cst_42 {dimension_numbers = #tpu.dot_dimension_numbers<[1], [0], [0], [1], [0, 0, 1, 1], [], []>} : vector<16x8xf32>, vector<8x32xf32>, vector<16x32xf32> -> vector<16x32xf32>
    %74 = arith.addf %40, %73 : vector<16x32xf32>
    %c2 = arith.constant 2 : index
    %c0_43 = arith.constant 0 : index
    %c0_44 = arith.constant 0 : index
    %75 = vector.load %arg3[%c2, %c0_43, %c0_44] : memref<4x32x8xf32, #tpu.memory_space<vmem>>, vector<1x32x8xf32>
    %76 = vector.shape_cast %75 : vector<1x32x8xf32> to vector<32x8xf32>
    %cst_45 = arith.constant dense<0.000000e+00> : vector<64x8xf32>
    %77 = tpu.matmul %1, %76, %cst_45 {dimension_numbers = #tpu.dot_dimension_numbers<[1], [0], [0], [1], [0, 0, 1, 1], [], []>} : vector<64x32xf32>, vector<32x8xf32>, vector<64x8xf32> -> vector<64x8xf32>
    %c2_46 = arith.constant 2 : index
    %c0_47 = arith.constant 0 : index
    %c0_48 = arith.constant 0 : index
    %78 = vector.load %arg4[%c2_46, %c0_47, %c0_48] : memref<4x1x8xf32, #tpu.memory_space<vmem>>, vector<1x1x8xf32>
    %79 = vector.shape_cast %78 : vector<1x1x8xf32> to vector<1x8xf32>
    %80 = vector.broadcast %79 : vector<1x8xf32> to vector<64x8xf32>
    %81 = arith.addf %77, %80 : vector<64x8xf32>
    %82 = vector.shape_cast %81 : vector<64x8xf32> to vector<4x16x8xf32>
    "tpu.trace_start"() <{level = 10 : i32, message = "nld,nmd->nlm"}> : () -> ()
    %cst_49 = arith.constant dense<0.000000e+00> : vector<4x16x16xf32>
    %83 = tpu.matmul %82, %82, %cst_49 {dimension_numbers = #tpu.dot_dimension_numbers<[2], [2], [1], [1], [0, 0, 0, 1, 1, 1], [0], [0]>} : vector<4x16x8xf32>, vector<4x16x8xf32>, vector<4x16x16xf32> -> vector<4x16x16xf32>
    "tpu.trace_stop"() : () -> ()
    %cst_50 = arith.constant 0.353553385 : f32
    %84 = vector.broadcast %cst_50 : f32 to vector<4x16x16xf32>
    %85 = arith.mulf %83, %84 : vector<4x16x16xf32>
    %86 = vector.shape_cast %5 : vector<16x16xi1> to vector<1x16x16xi1>
    %cst_51 = arith.constant -6.500000e+04 : f32
    %87 = vector.shape_cast %86 : vector<1x16x16xi1> to vector<1x16x16xi1>
    %88 = vector.broadcast %87 : vector<1x16x16xi1> to vector<4x16x16xi1>
    %89 = vector.broadcast %cst_51 : f32 to vector<4x16x16xf32>
    %90 = arith.select %88, %85, %89 : vector<4x16x16xi1>, vector<4x16x16xf32>
    %cst_52 = arith.constant dense<0xFF800000> : vector<4x16xf32>
    %91 = vector.multi_reduction <maximumf>, %90, %cst_52 [2] : vector<4x16x16xf32> to vector<4x16xf32>
    %92 = vector.shape_cast %91 : vector<4x16xf32> to vector<4x16x1xf32>
    %93 = vector.broadcast %92 : vector<4x16x1xf32> to vector<4x16x16xf32>
    %94 = arith.subf %90, %93 : vector<4x16x16xf32>
    %95 = math.exp %94 : vector<4x16x16xf32>
    %cst_53 = arith.constant dense<0.000000e+00> : vector<4x16xf32>
    %96 = vector.multi_reduction <add>, %95, %cst_53 [2] : vector<4x16x16xf32> to vector<4x16xf32>
    %97 = vector.shape_cast %96 : vector<4x16xf32> to vector<4x16x1xf32>
    %98 = tpu.reciprocal %97 {approx = true} : vector<4x16x1xf32> -> vector<4x16x1xf32>
    %99 = vector.broadcast %98 : vector<4x16x1xf32> to vector<4x16x16xf32>
    %100 = arith.mulf %95, %99 : vector<4x16x16xf32>
    "tpu.trace_start"() <{level = 10 : i32, message = "nlm,nmd->nld"}> : () -> ()
    %cst_54 = arith.constant dense<0.000000e+00> : vector<4x16x8xf32>
    %101 = tpu.matmul %100, %82, %cst_54 {dimension_numbers = #tpu.dot_dimension_numbers<[2], [1], [1], [2], [0, 0, 0, 1, 1, 2], [0], [0]>} : vector<4x16x16xf32>, vector<4x16x8xf32>, vector<4x16x8xf32> -> vector<4x16x8xf32>
    "tpu.trace_stop"() : () -> ()
    %cst_55 = arith.constant dense<0.000000e+00> : vector<16x8xf32>
    %102 = vector.multi_reduction <add>, %101, %cst_55 [0] : vector<4x16x8xf32> to vector<16x8xf32>
    %cst_56 = arith.constant 4.000000e+00 : f32
    %103 = vector.broadcast %cst_56 : f32 to vector<16x8xf32>
    %104 = arith.divf %102, %103 : vector<16x8xf32>
    %c2_57 = arith.constant 2 : index
    %c0_58 = arith.constant 0 : index
    %c0_59 = arith.constant 0 : index
    %105 = vector.load %arg5[%c2_57, %c0_58, %c0_59] : memref<4x8x32xf32, #tpu.memory_space<vmem>>, vector<1x8x32xf32>
    %106 = vector.shape_cast %105 : vector<1x8x32xf32> to vector<8x32xf32>
    %cst_60 = arith.constant dense<0.000000e+00> : vector<16x32xf32>
    %107 = tpu.matmul %104, %106, %cst_60 {dimension_numbers = #tpu.dot_dimension_numbers<[1], [0], [0], [1], [0, 0, 1, 1], [], []>} : vector<16x8xf32>, vector<8x32xf32>, vector<16x32xf32> -> vector<16x32xf32>
    %108 = arith.addf %74, %107 : vector<16x32xf32>
    %c3 = arith.constant 3 : index
    %c0_61 = arith.constant 0 : index
    %c0_62 = arith.constant 0 : index
    %109 = vector.load %arg3[%c3, %c0_61, %c0_62] : memref<4x32x8xf32, #tpu.memory_space<vmem>>, vector<1x32x8xf32>
    %110 = vector.shape_cast %109 : vector<1x32x8xf32> to vector<32x8xf32>
    %cst_63 = arith.constant dense<0.000000e+00> : vector<64x8xf32>
    %111 = tpu.matmul %1, %110, %cst_63 {dimension_numbers = #tpu.dot_dimension_numbers<[1], [0], [0], [1], [0, 0, 1, 1], [], []>} : vector<64x32xf32>, vector<32x8xf32>, vector<64x8xf32> -> vector<64x8xf32>
    %c3_64 = arith.constant 3 : index
    %c0_65 = arith.constant 0 : index
    %c0_66 = arith.constant 0 : index
    %112 = vector.load %arg4[%c3_64, %c0_65, %c0_66] : memref<4x1x8xf32, #tpu.memory_space<vmem>>, vector<1x1x8xf32>
    %113 = vector.shape_cast %112 : vector<1x1x8xf32> to vector<1x8xf32>
    %114 = vector.broadcast %113 : vector<1x8xf32> to vector<64x8xf32>
    %115 = arith.addf %111, %114 : vector<64x8xf32>
    %116 = vector.shape_cast %115 : vector<64x8xf32> to vector<4x16x8xf32>
    "tpu.trace_start"() <{level = 10 : i32, message = "nld,nmd->nlm"}> : () -> ()
    %cst_67 = arith.constant dense<0.000000e+00> : vector<4x16x16xf32>
    %117 = tpu.matmul %116, %116, %cst_67 {dimension_numbers = #tpu.dot_dimension_numbers<[2], [2], [1], [1], [0, 0, 0, 1, 1, 1], [0], [0]>} : vector<4x16x8xf32>, vector<4x16x8xf32>, vector<4x16x16xf32> -> vector<4x16x16xf32>
    "tpu.trace_stop"() : () -> ()
    %cst_68 = arith.constant 0.353553385 : f32
    %118 = vector.broadcast %cst_68 : f32 to vector<4x16x16xf32>
    %119 = arith.mulf %117, %118 : vector<4x16x16xf32>
    %120 = vector.shape_cast %5 : vector<16x16xi1> to vector<1x16x16xi1>
    %cst_69 = arith.constant -6.500000e+04 : f32
    %121 = vector.shape_cast %120 : vector<1x16x16xi1> to vector<1x16x16xi1>
    %122 = vector.broadcast %121 : vector<1x16x16xi1> to vector<4x16x16xi1>
    %123 = vector.broadcast %cst_69 : f32 to vector<4x16x16xf32>
    %124 = arith.select %122, %119, %123 : vector<4x16x16xi1>, vector<4x16x16xf32>
    %cst_70 = arith.constant dense<0xFF800000> : vector<4x16xf32>
    %125 = vector.multi_reduction <maximumf>, %124, %cst_70 [2] : vector<4x16x16xf32> to vector<4x16xf32>
    %126 = vector.shape_cast %125 : vector<4x16xf32> to vector<4x16x1xf32>
    %127 = vector.broadcast %126 : vector<4x16x1xf32> to vector<4x16x16xf32>
    %128 = arith.subf %124, %127 : vector<4x16x16xf32>
    %129 = math.exp %128 : vector<4x16x16xf32>
    %cst_71 = arith.constant dense<0.000000e+00> : vector<4x16xf32>
    %130 = vector.multi_reduction <add>, %129, %cst_71 [2] : vector<4x16x16xf32> to vector<4x16xf32>
    %131 = vector.shape_cast %130 : vector<4x16xf32> to vector<4x16x1xf32>
    %132 = tpu.reciprocal %131 {approx = true} : vector<4x16x1xf32> -> vector<4x16x1xf32>
    %133 = vector.broadcast %132 : vector<4x16x1xf32> to vector<4x16x16xf32>
    %134 = arith.mulf %129, %133 : vector<4x16x16xf32>
    "tpu.trace_start"() <{level = 10 : i32, message = "nlm,nmd->nld"}> : () -> ()
    %cst_72 = arith.constant dense<0.000000e+00> : vector<4x16x8xf32>
    %135 = tpu.matmul %134, %116, %cst_72 {dimension_numbers = #tpu.dot_dimension_numbers<[2], [1], [1], [2], [0, 0, 0, 1, 1, 2], [0], [0]>} : vector<4x16x16xf32>, vector<4x16x8xf32>, vector<4x16x8xf32> -> vector<4x16x8xf32>
    "tpu.trace_stop"() : () -> ()
    %cst_73 = arith.constant dense<0.000000e+00> : vector<16x8xf32>
    %136 = vector.multi_reduction <add>, %135, %cst_73 [0] : vector<4x16x8xf32> to vector<16x8xf32>
    %cst_74 = arith.constant 4.000000e+00 : f32
    %137 = vector.broadcast %cst_74 : f32 to vector<16x8xf32>
    %138 = arith.divf %136, %137 : vector<16x8xf32>
    %c3_75 = arith.constant 3 : index
    %c0_76 = arith.constant 0 : index
    %c0_77 = arith.constant 0 : index
    %139 = vector.load %arg5[%c3_75, %c0_76, %c0_77] : memref<4x8x32xf32, #tpu.memory_space<vmem>>, vector<1x8x32xf32>
    %140 = vector.shape_cast %139 : vector<1x8x32xf32> to vector<8x32xf32>
    %cst_78 = arith.constant dense<0.000000e+00> : vector<16x32xf32>
    %141 = tpu.matmul %138, %140, %cst_78 {dimension_numbers = #tpu.dot_dimension_numbers<[1], [0], [0], [1], [0, 0, 1, 1], [], []>} : vector<16x8xf32>, vector<8x32xf32>, vector<16x32xf32> -> vector<16x32xf32>
    %142 = arith.addf %108, %141 : vector<16x32xf32>
    %c0_79 = arith.constant 0 : index
    %c0_80 = arith.constant 0 : index
    %143 = vector.load %arg6[%c0_79, %c0_80] : memref<1x32xf32, #tpu.memory_space<vmem>>, vector<1x32xf32>
    %144 = vector.broadcast %143 : vector<1x32xf32> to vector<16x32xf32>
    %145 = arith.addf %142, %144 : vector<16x32xf32>
    %146 = tpu.concatenate %145, %145, %145, %145, %145, %145, %145, %145, %145, %145, %145, %145, %145, %145, %145, %145 in 1 : vector<16x32xf32>, vector<16x32xf32>, vector<16x32xf32>, vector<16x32xf32>, vector<16x32xf32>, vector<16x32xf32>, vector<16x32xf32>, vector<16x32xf32>, vector<16x32xf32>, vector<16x32xf32>, vector<16x32xf32>, vector<16x32xf32>, vector<16x32xf32>, vector<16x32xf32>, vector<16x32xf32>, vector<16x32xf32> -> vector<16x512xf32>
    %c0_81 = arith.constant 0 : index
    %c0_82 = arith.constant 0 : index
    %c0_83 = arith.constant 0 : index
    %147 = vector.load %arg7[%c0_81, %c0_82, %c0_83] : memref<1x16x512xf32, #tpu.memory_space<vmem>>, vector<1x16x512xf32>
    %148 = vector.shape_cast %147 : vector<1x16x512xf32> to vector<16x512xf32>
    %149 = vector.shape_cast %146 : vector<16x512xf32> to vector<1x16x512xf32>
    tpu.vector_store %arg7[%c0_81, %c0_82, %c0_83], %149 {strides = array<i32>} : memref<1x16x512xf32, #tpu.memory_space<vmem>>, vector<1x16x512xf32>,
    return
  }
  func.func @transform_0(%arg0: i32) -> (i32, i32, i32) {
    %c0_i32 = arith.constant 0 : i32
    %c0_i32_0 = arith.constant 0 : i32
    %c0_i32_1 = arith.constant 0 : i32
    return %arg0, %c0_i32, %c0_i32_0 : i32, i32, i32
  }
  func.func @transform_1(%arg0: i32) -> (i32, i32, i32) {
    %c0_i32 = arith.constant 0 : i32
    %c0_i32_0 = arith.constant 0 : i32
    %c0_i32_1 = arith.constant 0 : i32
    return %arg0, %c0_i32, %c0_i32_0 : i32, i32, i32
  }
  func.func @transform_2(%arg0: i32) -> (i32, i32, i32) {
    %c0_i32 = arith.constant 0 : i32
    %c0_i32_0 = arith.constant 0 : i32
    %c0_i32_1 = arith.constant 0 : i32
    %c0_i32_2 = arith.constant 0 : i32
    return %c0_i32, %c0_i32_0, %c0_i32_1 : i32, i32, i32
  }
  func.func @transform_3(%arg0: i32) -> (i32, i32, i32) {
    %c0_i32 = arith.constant 0 : i32
    %c0_i32_0 = arith.constant 0 : i32
    %c0_i32_1 = arith.constant 0 : i32
    %c0_i32_2 = arith.constant 0 : i32
    return %c0_i32, %c0_i32_0, %c0_i32_1 : i32, i32, i32
  }
  func.func @transform_4(%arg0: i32) -> (i32, i32, i32) {
    %c0_i32 = arith.constant 0 : i32
    %c0_i32_0 = arith.constant 0 : i32
    %c0_i32_1 = arith.constant 0 : i32
    %c0_i32_2 = arith.constant 0 : i32
    return %c0_i32, %c0_i32_0, %c0_i32_1 : i32, i32, i32
  }
  func.func @transform_5(%arg0: i32) -> (i32, i32) {
    %c0_i32 = arith.constant 0 : i32
    %c0_i32_0 = arith.constant 0 : i32
    %c0_i32_1 = arith.constant 0 : i32
    return %c0_i32, %c0_i32_0 : i32, i32
  }
  func.func @transform_6(%arg0: i32) -> (i32, i32, i32) {
    %c0_i32 = arith.constant 0 : i32
    %c0_i32_0 = arith.constant 0 : i32
    %c0_i32_1 = arith.constant 0 : i32
    return %arg0, %c0_i32, %c0_i32_0 : i32, i32, i32
  }
}

</mosaic_0001>

<llo_original>
// kernel: msa_pair_attention_forward.1
$region0: #{msa_pair_attention_forward.1}
  #allocation0 [shape = 'u32[]', space=smem, size = 0x4, offset = 0x4, fixed_abs, tag = 'smem constant byte address 0x4 - core index']
  #allocation1 [shape = 'u32[72,128]{1,0:T(1,128)}', space=vmem, size = 0x9000, scoped, tag = 'internal scratch']
  %s0 = inlined_call_operand.vmem [shape: f32[2,64,32], index: 0, kind: input, shape index: {}]
  %s1 = inlined_call_operand.vmem [shape: f32[2,16,16], index: 1, kind: input, shape index: {}]
  %s2 = inlined_call_operand.vmem [shape: f32[4,32,8], index: 2, kind: input, shape index: {}]
  %s3 = inlined_call_operand.vmem [shape: f32[4,1,8], index: 3, kind: input, shape index: {}]
  %s4 = inlined_call_operand.vmem [shape: f32[4,8,32], index: 4, kind: input, shape index: {}]
  %s5 = inlined_call_operand.vmem [shape: f32[1,32], index: 5, kind: input, shape index: {}]
  %s6 = inlined_call_operand.vmem [shape: f32[2,16,512], index: 6, kind: output, shape index: {}]
  %s7 = sld [smem:[#allocation0]]
  $region57: #{msa_pair_attention_forward.1} parent=0
    _
  %s9 = ssub.s32 1, %s7
  %s10 = scalar_select 0, %s9, %s7
  loop: start=0, step=1, limit=4
  $region2: #{msa_pair_attention_forward.1} parent=0 // loop_pre_header
    _
  $region3: #{msa_pair_attention_forward.1} parent=0 // loop_header
    %s12 = sphi 0, %s16
    %p13 = scmp.ge.s32.totalorder %s12, 4
    %s22 = sphi 0, %s24
    %s25 = sphi 0, %s22
    %s26 = sphi 0, %s25
    %s42 = sphi 0, %s26
    %s48 = sphi 0, %s50
    %s51 = sphi 0, %s48
    %s52 = sphi 0, %s51
    %s68 = sphi 0, %s52
    %s72 = sphi 0, %s72
    %s74 = sphi 0, %s72
    %s75 = sphi 0, %s74
    %s89 = sphi 0, %s75
    %s93 = sphi 0, %s93
    %s95 = sphi 0, %s93
    %s96 = sphi 0, %s95
    %s110 = sphi 0, %s96
    %s114 = sphi 0, %s114
    %s116 = sphi 0, %s114
    %s117 = sphi 0, %s116
    %s131 = sphi 0, %s117
    %s135 = sphi 0, %s135
    %s137 = sphi 0, %s135
    %s138 = sphi 0, %s137
    %s152 = sphi 0, %s138
    %s158 = sphi 0, %s160
    %s161 = sphi 0, %s158
    %s162 = sphi 0, %s161
    %s178 = sphi 0, %s162
  $region4: #{msa_pair_attention_forward.1} parent=0 // loop_header_branch
    %15 = sbr.rel (%p13) target = $region8
  $region5: #{msa_pair_attention_forward.1} parent=0 // loop_body
    %s17 = ssub.s32 %s12, 1
    %s18 = ssub.s32 %s12, 2
    %s19 = sadd.s32 %s12, 1
    %s20 = ssub.s32 %s12, %s19
    %p21 = scmp.eq.s32.totalorder %s20, 0
    %s23 = sadd.s32 %s22, 1
    %s24 = scalar_select %p21, %s22, %s23
    %p27 = pneg %p21
    %p28 = scmp.eq.s32.totalorder %s12, 1
    %p29 = por %p27, %p28
    %p30 = scmp.ne.s32.totalorder %s22, %s25
    %p31 = scmp.eq.s32.totalorder %s12, 0
    %p32 = por %p30, %p31
    %p33 = scmp.ne.s32.totalorder %s22, %s25
    %p34 = scmp.eq.s32.totalorder %s17, 1
    %p35 = por %p33, %p34
    %p36 = scmp.ne.s32.totalorder %s25, %s26
    %p37 = scmp.eq.s32.totalorder %s17, 0
    %p38 = por %p36, %p37
    %p39 = scmp.ne.s32.totalorder %s25, %s26
    %p40 = scmp.eq.s32.totalorder %s18, 1
    %p41 = por %p39, %p40
    %p43 = scmp.ne.s32.totalorder %s26, %s42
    %p44 = scmp.eq.s32.totalorder %s18, 0
    %p45 = por %p43, %p44
    %s46 = ssub.s32 %s12, %s19
    %p47 = scmp.eq.s32.totalorder %s46, 0
    %s49 = sadd.s32 %s48, 1
    %s50 = scalar_select %p47, %s48, %s49
    %p53 = pneg %p47
    %p54 = scmp.eq.s32.totalorder %s12, 1
    %p55 = por %p53, %p54
    %p56 = scmp.ne.s32.totalorder %s48, %s51
    %p57 = scmp.eq.s32.totalorder %s12, 0
    %p58 = por %p56, %p57
    %p59 = scmp.ne.s32.totalorder %s48, %s51
    %p60 = scmp.eq.s32.totalorder %s17, 1
    %p61 = por %p59, %p60
    %p62 = scmp.ne.s32.totalorder %s51, %s52
    %p63 = scmp.eq.s32.totalorder %s17, 0
    %p64 = por %p62, %p63
    %p65 = scmp.ne.s32.totalorder %s51, %s52
    %p66 = scmp.eq.s32.totalorder %s18, 1
    %p67 = por %p65, %p66
    %p69 = scmp.ne.s32.totalorder %s52, %s68
    %p70 = scmp.eq.s32.totalorder %s18, 0
    %p71 = por %p69, %p70
    %s73 = sadd.s32 %s72, 1
    %p76 = scmp.eq.s32.totalorder %s12, 1
    %p77 = scmp.ne.s32.totalorder %s72, %s74
    %p78 = scmp.eq.s32.totalorder %s12, 0
    %p79 = por %p77, %p78
    %p80 = scmp.ne.s32.totalorder %s72, %s74
    %p81 = scmp.eq.s32.totalorder %s17, 1
    %p82 = por %p80, %p81
    %p83 = scmp.ne.s32.totalorder %s74, %s75
    %p84 = scmp.eq.s32.totalorder %s17, 0
    %p85 = por %p83, %p84
    %p86 = scmp.ne.s32.totalorder %s74, %s75
    %p87 = scmp.eq.s32.totalorder %s18, 1
    %p88 = por %p86, %p87
    %p90 = scmp.ne.s32.totalorder %s75, %s89
    %p91 = scmp.eq.s32.totalorder %s18, 0
    %p92 = por %p90, %p91
    %s94 = sadd.s32 %s93, 1
    %p97 = scmp.eq.s32.totalorder %s12, 1
    %p98 = scmp.ne.s32.totalorder %s93, %s95
    %p99 = scmp.eq.s32.totalorder %s12, 0
    %p100 = por %p98, %p99
    %p101 = scmp.ne.s32.totalorder %s93, %s95
    %p102 = scmp.eq.s32.totalorder %s17, 1
    %p103 = por %p101, %p102
    %p104 = scmp.ne.s32.totalorder %s95, %s96
    %p105 = scmp.eq.s32.totalorder %s17, 0
    %p106 = por %p104, %p105
    %p107 = scmp.ne.s32.totalorder %s95, %s96
    %p108 = scmp.eq.s32.totalorder %s18, 1
    %p109 = por %p107, %p108
    %p111 = scmp.ne.s32.totalorder %s96, %s110
    %p112 = scmp.eq.s32.totalorder %s18, 0
    %p113 = por %p111, %p112
    %s115 = sadd.s32 %s114, 1
    %p118 = scmp.eq.s32.totalorder %s12, 1
    %p119 = scmp.ne.s32.totalorder %s114, %s116
    %p120 = scmp.eq.s32.totalorder %s12, 0
    %p121 = por %p119, %p120
    %p122 = scmp.ne.s32.totalorder %s114, %s116
    %p123 = scmp.eq.s32.totalorder %s17, 1
    %p124 = por %p122, %p123
    %p125 = scmp.ne.s32.totalorder %s116, %s117
    %p126 = scmp.eq.s32.totalorder %s17, 0
    %p127 = por %p125, %p126
    %p128 = scmp.ne.s32.totalorder %s116, %s117
    %p129 = scmp.eq.s32.totalorder %s18, 1
    %p130 = por %p128, %p129
    %p132 = scmp.ne.s32.totalorder %s117, %s131
    %p133 = scmp.eq.s32.totalorder %s18, 0
    %p134 = por %p132, %p133
    %s136 = sadd.s32 %s135, 1
    %p139 = scmp.eq.s32.totalorder %s12, 1
    %p140 = scmp.ne.s32.totalorder %s135, %s137
    %p141 = scmp.eq.s32.totalorder %s12, 0
    %p142 = por %p140, %p141
    %p143 = scmp.ne.s32.totalorder %s135, %s137
    %p144 = scmp.eq.s32.totalorder %s17, 1
    %p145 = por %p143, %p144
    %p146 = scmp.ne.s32.totalorder %s137, %s138
    %p147 = scmp.eq.s32.totalorder %s17, 0
    %p148 = por %p146, %p147
    %p149 = scmp.ne.s32.totalorder %s137, %s138
    %p150 = scmp.eq.s32.totalorder %s18, 1
    %p151 = por %p149, %p150
    %p153 = scmp.ne.s32.totalorder %s138, %s152
    %p154 = scmp.eq.s32.totalorder %s18, 0
    %p155 = por %p153, %p154
    %s156 = ssub.s32 %s12, %s19
    %p157 = scmp.eq.s32.totalorder %s156, 0
    %s159 = sadd.s32 %s158, 1
    %s160 = scalar_select %p157, %s158, %s159
    %p163 = pneg %p157
    %p164 = scmp.eq.s32.totalorder %s12, 1
    %p165 = por %p163, %p164
    %p166 = scmp.ne.s32.totalorder %s158, %s161
    %p167 = scmp.eq.s32.totalorder %s12, 0
    %p168 = por %p166, %p167
    %p169 = scmp.ne.s32.totalorder %s158, %s161
    %p170 = scmp.eq.s32.totalorder %s17, 1
    %p171 = por %p169, %p170
    %p172 = scmp.ne.s32.totalorder %s161, %s162
    %p173 = scmp.eq.s32.totalorder %s17, 0
    %p174 = por %p172, %p173
    %p175 = scmp.ne.s32.totalorder %s161, %s162
    %p176 = scmp.eq.s32.totalorder %s18, 1
    %p177 = por %p175, %p176
    %p179 = scmp.ne.s32.totalorder %s162, %s178
    %p180 = scmp.eq.s32.totalorder %s18, 0
    %p181 = por %p179, %p180
    %p182 = scmp.le.s32.totalorder 1, %s12
    %p183 = scmp.lt.s32.totalorder %s12, 3
    %p184 = pnand %p182, %p183
    %p185 = pneg %p184
    // Predicated region
    $region9: #{msa_pair_attention_forward.1} parent=5 // pred_check
      _
    $region10: #{msa_pair_attention_forward.1} parent=5 // pred_check_branch
      %187 = sbr.rel (%p184) target = $region12
    $region11: #{msa_pair_attention_forward.1} parent=5 // pred_region
      %s188 = ssub.s32 %s12, 1
      // Predicated region
      $region13: #{msa_pair_attention_forward.1} parent=11 // pred_check
        %p189 = pneg %p85
      $region14: #{msa_pair_attention_forward.1} parent=11 // pred_check_branch
        %191 = sbr.rel (%p189) target = $region16
      $region15: #{msa_pair_attention_forward.1} parent=11 // pred_region
        _
      $region16: #{msa_pair_attention_forward.1} parent=11 // pred_fallthru
        _
      // Predicated region
      $region17: #{msa_pair_attention_forward.1} parent=11 // pred_check
        %p192 = pneg %p106
      $region18: #{msa_pair_attention_forward.1} parent=11 // pred_check_branch
        %194 = sbr.rel (%p192) target = $region20
      $region19: #{msa_pair_attention_forward.1} parent=11 // pred_region
        _
      $region20: #{msa_pair_attention_forward.1} parent=11 // pred_fallthru
        _
      // Predicated region
      $region21: #{msa_pair_attention_forward.1} parent=11 // pred_check
        %p195 = pneg %p127
      $region22: #{msa_pair_attention_forward.1} parent=11 // pred_check_branch
        %197 = sbr.rel (%p195) target = $region24
      $region23: #{msa_pair_attention_forward.1} parent=11 // pred_region
        _
      $region24: #{msa_pair_attention_forward.1} parent=11 // pred_fallthru
        _
      // Predicated region
      $region25: #{msa_pair_attention_forward.1} parent=11 // pred_check
        %p198 = pneg %p148
      $region26: #{msa_pair_attention_forward.1} parent=11 // pred_check_branch
        %200 = sbr.rel (%p198) target = $region28
      $region27: #{msa_pair_attention_forward.1} parent=11 // pred_region
        _
      $region28: #{msa_pair_attention_forward.1} parent=11 // pred_fallthru
        _
    $region12: #{msa_pair_attention_forward.1} parent=5 // pred_fallthru
      _
    %p201 = scmp.lt.s32.totalorder %s12, 2
    // Predicated region
    $region29: #{msa_pair_attention_forward.1} parent=5 // pred_check
      %p202 = pneg %p201
    $region30: #{msa_pair_attention_forward.1} parent=5 // pred_check_branch
      %204 = sbr.rel (%p202) target = $region32
    $region31: #{msa_pair_attention_forward.1} parent=5 // pred_region
      // Predicated region
      $region33: #{msa_pair_attention_forward.1} parent=31 // pred_check
        %p205 = pneg %p32
      $region34: #{msa_pair_attention_forward.1} parent=31 // pred_check_branch
        %207 = sbr.rel (%p205) target = $region36
      $region35: #{msa_pair_attention_forward.1} parent=31 // pred_region
        %p208 = scmp.lt.s32.totalorder %s12, 1
        %s209 = scalar_select %p208, %s12, 1
        %s210 = smul.addr %s209, 8
        %s211 = smul.addr %s210, 8
        %s212 = scalar_lea.vmem %s0, %s211
      $region36: #{msa_pair_attention_forward.1} parent=31 // pred_fallthru
        _
      // Predicated region
      $region37: #{msa_pair_attention_forward.1} parent=31 // pred_check
        %p213 = pneg %p58
      $region38: #{msa_pair_attention_forward.1} parent=31 // pred_check_branch
        %215 = sbr.rel (%p213) target = $region40
      $region39: #{msa_pair_attention_forward.1} parent=31 // pred_region
        %p216 = scmp.lt.s32.totalorder %s12, 1
        %s217 = scalar_select %p216, %s12, 1
        %s218 = smul.addr %s217, 2
        %s219 = smul.addr %s218, 8
        %s220 = scalar_lea.vmem %s1, %s219
      $region40: #{msa_pair_attention_forward.1} parent=31 // pred_fallthru
        _
    $region32: #{msa_pair_attention_forward.1} parent=5 // pred_fallthru
      _
    %p221 = scmp.le.s32.totalorder 1, %s12
    %p222 = scmp.lt.s32.totalorder %s12, 3
    %p223 = pnand %p221, %p222
    %p224 = pneg %p223
    // Predicated region
    $region41: #{msa_pair_attention_forward.1} parent=5 // pred_check
      _
    $region42: #{msa_pair_attention_forward.1} parent=5 // pred_check_branch
      %226 = sbr.rel (%p223) target = $region44
    $region43: #{msa_pair_attention_forward.1} parent=5 // pred_region
      %s227 = ssub.s32 %s12, 1
      %p228 = scmp.lt.s32.totalorder %s17, 1
      %s229 = scalar_select %p228, %s17, 1
      %s230 = smul.addr %s229, 8
      %s231 = smul.addr %s230, 8
      %s232 = scalar_lea.vmem %s0, %s231
      %p233 = pneg %p38
      %p234 = pneg %p35
      %p235 = scmp.lt.s32.totalorder %s17, 1
      %s236 = scalar_select %p235, %s17, 1
      %s237 = smul.addr %s236, 2
      %s238 = smul.addr %s237, 8
      %s239 = scalar_lea.vmem %s1, %s238
      %p240 = pneg %p64
      %p241 = pneg %p61
      %p242 = pneg %p85
      %p243 = pneg %p82
      %p244 = pneg %p106
      %p245 = pneg %p103
      %p246 = pneg %p127
      %p247 = pneg %p124
      %p248 = pneg %p148
      %p249 = pneg %p145
      %p250 = pneg %p174
      %p251 = pneg %p171
      %p252 = scmp.lt.s32.totalorder %s17, 1
      %s253 = scalar_select %p252, %s17, 1
      %s254 = smul.addr %s253, 8
      %s255 = smul.addr %s254, 8
      %s256 = scalar_lea.vmem %s6, %s255
      %p257 = scmp.lt.s32.totalorder %s17, 1
      %s258 = scalar_select %p257, %s17, 1
      %s259 = smul.addr %s258, 8
      %s260 = smul.addr %s259, 8
      %s261 = scalar_lea.vmem %s0, %s260
      %p262 = scmp.lt.s32.totalorder %s17, 1
      %s263 = scalar_select %p262, %s17, 1
      %s264 = smul.addr %s263, 2
      %s265 = smul.addr %s264, 8
      %s266 = scalar_lea.vmem %s1, %s265
      %p267 = scmp.lt.s32.totalorder %s17, 1
      %s268 = scalar_select %p267, %s17, 1
      %s269 = smul.addr %s268, 8
      %s270 = smul.addr %s269, 8
      %s271 = scalar_lea.vmem %s6, %s270
      %v272 = vld [vmem:[%s261] sm:$0xff]
      %v273 = vld [vmem:[%s261 + $0x8] sm:$0xff]
      %v274 = vld [vmem:[%s261 + $0x10] sm:$0xff]
      %v275 = vld [vmem:[%s261 + $0x18] sm:$0xff]
      %v276 = vld [vmem:[%s261 + $0x20] sm:$0xff]
      %v277 = vld [vmem:[%s261 + $0x28] sm:$0xff]
      %v278 = vld [vmem:[%s261 + $0x30] sm:$0xff]
      %v279 = vld [vmem:[%s261 + $0x38] sm:$0xff]
      %v280 = vld [vmem:[%s266] sm:$0xff]
      %v281 = vld [vmem:[%s266 + $0x8] sm:$0xff]
      %vm282 = vcmp.gt.f32.partialorder %v280, 0.0
      %vm283 = vcmp.gt.f32.partialorder %v281, 0.0
      %v284 = vld [vmem:[%s2] sm:$0xff]
      %v285 = vld [vmem:[%s2 + $0x8] sm:$0xff]
      %v286 = vld [vmem:[%s2 + $0x10] sm:$0xff]
      %v287 = vld [vmem:[%s2 + $0x18] sm:$0xff]
      %v288 = vld [vmem:[%s3] sm:$0x1]
      %v290 = vperm.slane %v288, 0
      %vm292 = vcmask 261120
      %v294 = vsel %vm292, %v272, 0
      %v297 = vsel %vm292, %v273, 0
      %v300 = vsel %vm292, %v274, 0
      %v303 = vsel %vm292, %v275, 0
      %v306 = vsel %vm292, %v276, 0
      %v309 = vsel %vm292, %v277, 0
      %v312 = vsel %vm292, %v278, 0
      %v315 = vsel %vm292, %v279, 0
      %317 = vmatpush.msra.mxu0 0.0
      %318 = vmatpush.msra.mxu0 0.0
      %319 = vmatpush.msra.mxu0 0.0
      %320 = vmatpush.msra.mxu0 0.0
      %321 = vmatpush.msra.mxu0 0.0
      %322 = vmatpush.msra.mxu0 0.0
      %323 = vmatpush.msra.mxu0 0.0
      %324 = vmatpush.msra.mxu0 0.0
      %325 = vmatpush.msra.mxu0 0.0
      %326 = vmatpush.msra.mxu0 0.0
      %327 = vmatpush.msra.mxu0 0.0
      %328 = vmatpush.msra.mxu0 0.0
      %329 = vmatpush.msra.mxu0 %v287
      %330 = vmatpush.msra.mxu0 %v286
      %331 = vmatpush.msra.mxu0 %v285
      %332 = vmatpush.msra.mxu0 %v284
      %333 = vmatmul.f32.gmra.mxu0 %v294
      %v334 = vpop.f32.mrf.mxu0
      %v335 = vadd.f32 %v290, %v334
      %336 = vmatmul.f32.gmra.mxu0 %v297
      %v337 = vpop.f32.mrf.mxu0
      %v338 = vadd.f32 %v290, %v337
      %339 = vmatmul.f32.gmra.mxu0 %v300
      %v340 = vpop.f32.mrf.mxu0
      %v341 = vadd.f32 %v290, %v340
      %342 = vmatmul.f32.gmra.mxu0 %v303
      %v343 = vpop.f32.mrf.mxu0
      %v344 = vadd.f32 %v290, %v343
      %345 = vmatmul.f32.gmra.mxu0 %v306
      %v346 = vpop.f32.mrf.mxu0
      %v347 = vadd.f32 %v290, %v346
      %348 = vmatmul.f32.gmra.mxu0 %v309
      %v349 = vpop.f32.mrf.mxu0
      %v350 = vadd.f32 %v290, %v349
      %351 = vmatmul.f32.gmra.mxu0 %v312
      %v352 = vpop.f32.mrf.mxu0
      %v353 = vadd.f32 %v290, %v352
      %354 = vmatmul.f32.gmra.mxu0 %v315
      %v355 = vpop.f32.mrf.mxu0
      %v356 = vadd.f32 %v290, %v355
      %357 = vdwg.mxu0
      %vm358 = vcmask 64512
      %v360 = vsel %vm358, %v335, 0
      %v363 = vsel %vm358, %v338, 0
      %365 = vmatpush.xpose.msra.mxu0 0.0
      %366 = vmatpush.xpose.msra.mxu0 0.0
      %367 = vmatpush.xpose.msra.mxu0 0.0
      %368 = vmatpush.xpose.msra.mxu0 0.0
      %369 = vmatpush.xpose.msra.mxu0 0.0
      %370 = vmatpush.xpose.msra.mxu0 0.0
      %371 = vmatpush.xpose.msra.mxu0 0.0
      %372 = vmatpush.xpose.msra.mxu0 0.0
      %373 = vmatpush.xpose.msra.mxu0 0.0
      %374 = vmatpush.xpose.msra.mxu0 0.0
      %375 = vmatpush.xpose.msra.mxu0 0.0
      %376 = vmatpush.xpose.msra.mxu0 0.0
      %377 = vmatpush.xpose.msra.mxu0 0.0
      %378 = vmatpush.xpose.msra.mxu0 0.0
      %379 = vmatpush.xpose.msra.mxu0 %v363
      %380 = vmatpush.xpose.msra.mxu0 %v360
      %381 = vmatmul.f32.gmra.mxu0 %v360
      %v382 = vpop.f32.mrf.mxu0
      %v383 = vadd.f32 0.0, %v382
      %384 = vmatmul.f32.gmra.mxu0 %v363
      %v385 = vpop.f32.mrf.mxu0
      %v386 = vadd.f32 0.0, %v385
      %387 = vdwg.mxu0
      %v389 = vsel %vm358, %v341, 0
      %v392 = vsel %vm358, %v344, 0
      %394 = vmatpush.xpose.msra.mxu0 0.0
      %395 = vmatpush.xpose.msra.mxu0 0.0
      %396 = vmatpush.xpose.msra.mxu0 0.0
      %397 = vmatpush.xpose.msra.mxu0 0.0
      %398 = vmatpush.xpose.msra.mxu0 0.0
      %399 = vmatpush.xpose.msra.mxu0 0.0
      %400 = vmatpush.xpose.msra.mxu0 0.0
      %401 = vmatpush.xpose.msra.mxu0 0.0
      %402 = vmatpush.xpose.msra.mxu0 0.0
      %403 = vmatpush.xpose.msra.mxu0 0.0
      %404 = vmatpush.xpose.msra.mxu0 0.0
      %405 = vmatpush.xpose.msra.mxu0 0.0
      %406 = vmatpush.xpose.msra.mxu0 0.0
      %407 = vmatpush.xpose.msra.mxu0 0.0
      %408 = vmatpush.xpose.msra.mxu0 %v392
      %409 = vmatpush.xpose.msra.mxu0 %v389
      %410 = vmatmul.f32.gmra.mxu0 %v389
      %v411 = vpop.f32.mrf.mxu0
      %v412 = vadd.f32 0.0, %v411
      %413 = vmatmul.f32.gmra.mxu0 %v392
      %v414 = vpop.f32.mrf.mxu0
      %v415 = vadd.f32 0.0, %v414
      %416 = vdwg.mxu0
      %v418 = vsel %vm358, %v347, 0
      %v421 = vsel %vm358, %v350, 0
      %423 = vmatpush.xpose.msra.mxu0 0.0
      %424 = vmatpush.xpose.msra.mxu0 0.0
      %425 = vmatpush.xpose.msra.mxu0 0.0
      %426 = vmatpush.xpose.msra.mxu0 0.0
      %427 = vmatpush.xpose.msra.mxu0 0.0
      %428 = vmatpush.xpose.msra.mxu0 0.0
      %429 = vmatpush.xpose.msra.mxu0 0.0
      %430 = vmatpush.xpose.msra.mxu0 0.0
      %431 = vmatpush.xpose.msra.mxu0 0.0
      %432 = vmatpush.xpose.msra.mxu0 0.0
      %433 = vmatpush.xpose.msra.mxu0 0.0
      %434 = vmatpush.xpose.msra.mxu0 0.0
      %435 = vmatpush.xpose.msra.mxu0 0.0
      %436 = vmatpush.xpose.msra.mxu0 0.0
      %437 = vmatpush.xpose.msra.mxu0 %v421
      %438 = vmatpush.xpose.msra.mxu0 %v418
      %439 = vmatmul.f32.gmra.mxu0 %v418
      %v440 = vpop.f32.mrf.mxu0
      %v441 = vadd.f32 0.0, %v440
      %442 = vmatmul.f32.gmra.mxu0 %v421
      %v443 = vpop.f32.mrf.mxu0
      %v444 = vadd.f32 0.0, %v443
      %445 = vdwg.mxu0
      %v447 = vsel %vm358, %v353, 0
      %v450 = vsel %vm358, %v356, 0
      %452 = vmatpush.xpose.msra.mxu0 0.0
      %453 = vmatpush.xpose.msra.mxu0 0.0
      %454 = vmatpush.xpose.msra.mxu0 0.0
      %455 = vmatpush.xpose.msra.mxu0 0.0
      %456 = vmatpush.xpose.msra.mxu0 0.0
      %457 = vmatpush.xpose.msra.mxu0 0.0
      %458 = vmatpush.xpose.msra.mxu0 0.0
      %459 = vmatpush.xpose.msra.mxu0 0.0
      %460 = vmatpush.xpose.msra.mxu0 0.0
      %461 = vmatpush.xpose.msra.mxu0 0.0
      %462 = vmatpush.xpose.msra.mxu0 0.0
      %463 = vmatpush.xpose.msra.mxu0 0.0
      %464 = vmatpush.xpose.msra.mxu0 0.0
      %465 = vmatpush.xpose.msra.mxu0 0.0
      %466 = vmatpush.xpose.msra.mxu0 %v450
      %467 = vmatpush.xpose.msra.mxu0 %v447
      %468 = vmatmul.f32.gmra.mxu0 %v447
      %v469 = vpop.f32.mrf.mxu0
      %v470 = vadd.f32 0.0, %v469
      %471 = vmatmul.f32.gmra.mxu0 %v450
      %v472 = vpop.f32.mrf.mxu0
      %v473 = vadd.f32 0.0, %v472
      %474 = vdwg.mxu0
      %v475 = vmul.f32 %v383, 0.35355338
      %v476 = vmul.f32 %v386, 0.35355338
      %v477 = vmul.f32 %v412, 0.35355338
      %v478 = vmul.f32 %v415, 0.35355338
      %v479 = vmul.f32 %v441, 0.35355338
      %v480 = vmul.f32 %v444, 0.35355338
      %v481 = vmul.f32 %v470, 0.35355338
      %v482 = vmul.f32 %v473, 0.35355338
      %v483 = vsel %vm282, 1, 0
      %v484 = vsel %vm283, 1, 0
      %vm485 = vcmp.eq.s32.totalorder %v483, 1
      %vm486 = vcmp.eq.s32.totalorder %v484, 1
      %v487 = vsel %vm485, %v475, -65000.0
      %v488 = vsel %vm486, %v476, -65000.0
      %v489 = vsel %vm485, %v477, -65000.0
      %v490 = vsel %vm486, %v478, -65000.0
      %v491 = vsel %vm485, %v479, -65000.0
      %v492 = vsel %vm486, %v480, -65000.0
      %v493 = vsel %vm485, %v481, -65000.0
      %v494 = vsel %vm486, %v482, -65000.0
      %vm495 = vcmask 130048
      %v496 = vsel %vm495, %v487, -inf
      %497 = vmax.xlane.f32.xlu0 %v496
      %v498 = vpop.xlane.xlu0 %497
      %v499 = vsel %vm495, %v488, -inf
      %500 = vmax.xlane.f32.xlu0 %v499
      %v501 = vpop.xlane.xlu0 %500
      %v502 = vsel %vm495, %v489, -inf
      %503 = vmax.xlane.f32.xlu0 %v502
      %v504 = vpop.xlane.xlu0 %503
      %v505 = vsel %vm495, %v490, -inf
      %506 = vmax.xlane.f32.xlu0 %v505
      %v507 = vpop.xlane.xlu0 %506
      %v508 = vsel %vm495, %v491, -inf
      %509 = vmax.xlane.f32.xlu0 %v508
      %v510 = vpop.xlane.xlu0 %509
      %v511 = vsel %vm495, %v492, -inf
      %512 = vmax.xlane.f32.xlu0 %v511
      %v513 = vpop.xlane.xlu0 %512
      %v514 = vsel %vm495, %v493, -inf
      %515 = vmax.xlane.f32.xlu0 %v514
      %v516 = vpop.xlane.xlu0 %515
      %v517 = vsel %vm495, %v494, -inf
      %518 = vmax.xlane.f32.xlu0 %v517
      %v519 = vpop.xlane.xlu0 %518
      %v520 = vsub.f32 %v487, %v498
      %v521 = vsub.f32 %v488, %v501
      %v522 = vsub.f32 %v489, %v504
      %v523 = vsub.f32 %v490, %v507
      %v524 = vsub.f32 %v491, %v510
      %v525 = vsub.f32 %v492, %v513
      %v526 = vsub.f32 %v493, %v516
      %v527 = vsub.f32 %v494, %v519
      %v528 = vmul.f32 %v520, 1.442695
      %v529 = vpow.pop %v528
      %v530 = vmul.f32 %v521, 1.442695
      %v531 = vpow.pop %v530
      %v532 = vmul.f32 %v522, 1.442695
      %v533 = vpow.pop %v532
      %v534 = vmul.f32 %v523, 1.442695
      %v535 = vpow.pop %v534
      %v536 = vmul.f32 %v524, 1.442695
      %v537 = vpow.pop %v536
      %v538 = vmul.f32 %v525, 1.442695
      %v539 = vpow.pop %v538
      %v540 = vmul.f32 %v526, 1.442695
      %v541 = vpow.pop %v540
      %v542 = vmul.f32 %v527, 1.442695
      %v543 = vpow.pop %v542
      %v544 = vsel %vm495, %v529, 0.0
      %545 = vadd.xlane.f32.xlu0 %v544
      %v546 = vpop.xlane.xlu0 %545
      %v547 = vsel %vm495, %v531, 0.0
      %548 = vadd.xlane.f32.xlu0 %v547
      %v549 = vpop.xlane.xlu0 %548
      %v550 = vsel %vm495, %v533, 0.0
      %551 = vadd.xlane.f32.xlu0 %v550
      %v552 = vpop.xlane.xlu0 %551
      %v553 = vsel %vm495, %v535, 0.0
      %554 = vadd.xlane.f32.xlu0 %v553
      %v555 = vpop.xlane.xlu0 %554
      %v556 = vsel %vm495, %v537, 0.0
      %557 = vadd.xlane.f32.xlu0 %v556
      %v558 = vpop.xlane.xlu0 %557
      %v559 = vsel %vm495, %v539, 0.0
      %560 = vadd.xlane.f32.xlu0 %v559
      %v561 = vpop.xlane.xlu0 %560
      %v562 = vsel %vm495, %v541, 0.0
      %563 = vadd.xlane.f32.xlu0 %v562
      %v564 = vpop.xlane.xlu0 %563
      %v565 = vsel %vm495, %v543, 0.0
      %566 = vadd.xlane.f32.xlu0 %v565
      %v567 = vpop.xlane.xlu0 %566
      %v568 = vrcp.pop %v546
      %v569 = vrcp.pop %v549
      %v570 = vrcp.pop %v552
      %v571 = vrcp.pop %v555
      %v572 = vrcp.pop %v558
      %v573 = vrcp.pop %v561
      %v574 = vrcp.pop %v564
      %v575 = vrcp.pop %v567
      %v576 = vmul.f32 %v529, %v568
      %v577 = vmul.f32 %v531, %v569
      %v578 = vmul.f32 %v533, %v570
      %v579 = vmul.f32 %v535, %v571
      %v580 = vmul.f32 %v537, %v572
      %v581 = vmul.f32 %v539, %v573
      %v582 = vmul.f32 %v541, %v574
      %v583 = vmul.f32 %v543, %v575
      %v585 = vsel %vm495, %v576, 0
      %v588 = vsel %vm495, %v577, 0
      %590 = vmatpush.msra.mxu0 0.0
      %591 = vmatpush.msra.mxu0 0.0
      %592 = vmatpush.msra.mxu0 0.0
      %593 = vmatpush.msra.mxu0 0.0
      %594 = vmatpush.msra.mxu0 0.0
      %595 = vmatpush.msra.mxu0 0.0
      %596 = vmatpush.msra.mxu0 0.0
      %597 = vmatpush.msra.mxu0 0.0
      %598 = vmatpush.msra.mxu0 0.0
      %599 = vmatpush.msra.mxu0 0.0
      %600 = vmatpush.msra.mxu0 0.0
      %601 = vmatpush.msra.mxu0 0.0
      %602 = vmatpush.msra.mxu0 0.0
      %603 = vmatpush.msra.mxu0 0.0
      %604 = vmatpush.msra.mxu0 %v338
      %605 = vmatpush.msra.mxu0 %v335
      %606 = vmatmul.f32.gmra.mxu0 %v585
      %v607 = vpop.f32.mrf.mxu0
      %v608 = vadd.f32 0.0, %v607
      %609 = vmatmul.f32.gmra.mxu0 %v588
      %v610 = vpop.f32.mrf.mxu0
      %v611 = vadd.f32 0.0, %v610
      %612 = vdwg.mxu0
      %v614 = vsel %vm495, %v578, 0
      %v617 = vsel %vm495, %v579, 0
      %619 = vmatpush.msra.mxu0 0.0
      %620 = vmatpush.msra.mxu0 0.0
      %621 = vmatpush.msra.mxu0 0.0
      %622 = vmatpush.msra.mxu0 0.0
      %623 = vmatpush.msra.mxu0 0.0
      %624 = vmatpush.msra.mxu0 0.0
      %625 = vmatpush.msra.mxu0 0.0
      %626 = vmatpush.msra.mxu0 0.0
      %627 = vmatpush.msra.mxu0 0.0
      %628 = vmatpush.msra.mxu0 0.0
      %629 = vmatpush.msra.mxu0 0.0
      %630 = vmatpush.msra.mxu0 0.0
      %631 = vmatpush.msra.mxu0 0.0
      %632 = vmatpush.msra.mxu0 0.0
      %633 = vmatpush.msra.mxu0 %v344
      %634 = vmatpush.msra.mxu0 %v341
      %635 = vmatmul.f32.gmra.mxu0 %v614
      %v636 = vpop.f32.mrf.mxu0
      %v637 = vadd.f32 0.0, %v636
      %638 = vmatmul.f32.gmra.mxu0 %v617
      %v639 = vpop.f32.mrf.mxu0
      %v640 = vadd.f32 0.0, %v639
      %641 = vdwg.mxu0
      %v643 = vsel %vm495, %v580, 0
      %v646 = vsel %vm495, %v581, 0
      %648 = vmatpush.msra.mxu0 0.0
      %649 = vmatpush.msra.mxu0 0.0
      %650 = vmatpush.msra.mxu0 0.0
      %651 = vmatpush.msra.mxu0 0.0
      %652 = vmatpush.msra.mxu0 0.0
      %653 = vmatpush.msra.mxu0 0.0
      %654 = vmatpush.msra.mxu0 0.0
      %655 = vmatpush.msra.mxu0 0.0
      %656 = vmatpush.msra.mxu0 0.0
      %657 = vmatpush.msra.mxu0 0.0
      %658 = vmatpush.msra.mxu0 0.0
      %659 = vmatpush.msra.mxu0 0.0
      %660 = vmatpush.msra.mxu0 0.0
      %661 = vmatpush.msra.mxu0 0.0
      %662 = vmatpush.msra.mxu0 %v350
      %663 = vmatpush.msra.mxu0 %v347
      %664 = vmatmul.f32.gmra.mxu0 %v643
      %v665 = vpop.f32.mrf.mxu0
      %v666 = vadd.f32 0.0, %v665
      %667 = vmatmul.f32.gmra.mxu0 %v646
      %v668 = vpop.f32.mrf.mxu0
      %v669 = vadd.f32 0.0, %v668
      %670 = vdwg.mxu0
      %v672 = vsel %vm495, %v582, 0
      %v675 = vsel %vm495, %v583, 0
      %677 = vmatpush.msra.mxu0 0.0
      %678 = vmatpush.msra.mxu0 0.0
      %679 = vmatpush.msra.mxu0 0.0
      %680 = vmatpush.msra.mxu0 0.0
      %681 = vmatpush.msra.mxu0 0.0
      %682 = vmatpush.msra.mxu0 0.0
      %683 = vmatpush.msra.mxu0 0.0
      %684 = vmatpush.msra.mxu0 0.0
      %685 = vmatpush.msra.mxu0 0.0
      %686 = vmatpush.msra.mxu0 0.0
      %687 = vmatpush.msra.mxu0 0.0
      %688 = vmatpush.msra.mxu0 0.0
      %689 = vmatpush.msra.mxu0 0.0
      %690 = vmatpush.msra.mxu0 0.0
      %691 = vmatpush.msra.mxu0 %v356
      %692 = vmatpush.msra.mxu0 %v353
      %693 = vmatmul.f32.gmra.mxu0 %v672
      %v694 = vpop.f32.mrf.mxu0
      %v695 = vadd.f32 0.0, %v694
      %696 = vmatmul.f32.gmra.mxu0 %v675
      %v697 = vpop.f32.mrf.mxu0
      %v698 = vadd.f32 0.0, %v697
      %699 = vdwg.mxu0
      %v700 = vsel %vm358, %v608, 0.0
      %v701 = vsel %vm358, %v637, 0.0
      %v702 = vadd.f32 %v700, %v701
      %v703 = vsel %vm358, %v666, 0.0
      %v704 = vadd.f32 %v702, %v703
      %v705 = vsel %vm358, %v695, 0.0
      %v706 = vadd.f32 %v704, %v705
      %v707 = vsel %vm358, %v611, 0.0
      %v708 = vsel %vm358, %v640, 0.0
      %v709 = vadd.f32 %v707, %v708
      %v710 = vsel %vm358, %v669, 0.0
      %v711 = vadd.f32 %v709, %v710
      %v712 = vsel %vm358, %v698, 0.0
      %v713 = vadd.f32 %v711, %v712
      %v714 = vrcp.pop 4.0
      %v715 = vmul.f32 4.0, %v714
      %v716 = vsub.f32 1.0, %v715
      %v717 = vmul.f32 %v714, %v716
      %v718 = vadd.f32 %v714, %v717
      %vm719 = vweird.f32 %v714
      %v720 = vsel %vm719, %v714, %v718
      %v721 = vmul.f32 %v706, %v720
      %v722 = vmul.f32 %v713, %v720
      %v723 = vld [vmem:[%s4] sm:$0xff]
      %s724 = scalar_lea.vmem %s2, 32
      %v725 = vld [vmem:[%s724] sm:$0xff]
      %v726 = vld [vmem:[%s724 + $0x8] sm:$0xff]
      %v727 = vld [vmem:[%s724 + $0x10] sm:$0xff]
      %v728 = vld [vmem:[%s724 + $0x18] sm:$0xff]
      %s729 = scalar_lea.vmem %s3, 1
      %v730 = vld [vmem:[%s729] sm:$0x1]
      %v732 = vperm.slane %v730, 0
      %734 = vmatpush.msra.mxu0 0.0
      %735 = vmatpush.msra.mxu0 0.0
      %736 = vmatpush.msra.mxu0 0.0
      %737 = vmatpush.msra.mxu0 0.0
      %738 = vmatpush.msra.mxu0 0.0
      %739 = vmatpush.msra.mxu0 0.0
      %740 = vmatpush.msra.mxu0 0.0
      %741 = vmatpush.msra.mxu0 0.0
      %742 = vmatpush.msra.mxu0 0.0
      %743 = vmatpush.msra.mxu0 0.0
      %744 = vmatpush.msra.mxu0 0.0
      %745 = vmatpush.msra.mxu0 0.0
      %746 = vmatpush.msra.mxu0 %v728
      %747 = vmatpush.msra.mxu0 %v727
      %748 = vmatpush.msra.mxu0 %v726
      %749 = vmatpush.msra.mxu0 %v725
      %750 = vmatmul.f32.gmra.mxu0 %v294
      %v751 = vpop.f32.mrf.mxu0
      %v752 = vadd.f32 %v732, %v751
      %753 = vmatmul.f32.gmra.mxu0 %v297
      %v754 = vpop.f32.mrf.mxu0
      %v755 = vadd.f32 %v732, %v754
      %756 = vmatmul.f32.gmra.mxu0 %v300
      %v757 = vpop.f32.mrf.mxu0
      %v758 = vadd.f32 %v732, %v757
      %759 = vmatmul.f32.gmra.mxu0 %v303
      %v760 = vpop.f32.mrf.mxu0
      %v761 = vadd.f32 %v732, %v760
      %762 = vmatmul.f32.gmra.mxu0 %v306
      %v763 = vpop.f32.mrf.mxu0
      %v764 = vadd.f32 %v732, %v763
      %765 = vmatmul.f32.gmra.mxu0 %v309
      %v766 = vpop.f32.mrf.mxu0
      %v767 = vadd.f32 %v732, %v766
      %768 = vmatmul.f32.gmra.mxu0 %v312
      %v769 = vpop.f32.mrf.mxu0
      %v770 = vadd.f32 %v732, %v769
      %771 = vmatmul.f32.gmra.mxu0 %v315
      %v772 = vpop.f32.mrf.mxu0
      %v773 = vadd.f32 %v732, %v772
      %774 = vdwg.mxu0
      %v776 = vsel %vm358, %v752, 0
      %v779 = vsel %vm358, %v755, 0
      %781 = vmatpush.xpose.msra.mxu0 0.0
      %782 = vmatpush.xpose.msra.mxu0 0.0
      %783 = vmatpush.xpose.msra.mxu0 0.0
      %784 = vmatpush.xpose.msra.mxu0 0.0
      %785 = vmatpush.xpose.msra.mxu0 0.0
      %786 = vmatpush.xpose.msra.mxu0 0.0
      %787 = vmatpush.xpose.msra.mxu0 0.0
      %788 = vmatpush.xpose.msra.mxu0 0.0
      %789 = vmatpush.xpose.msra.mxu0 0.0
      %790 = vmatpush.xpose.msra.mxu0 0.0
      %791 = vmatpush.xpose.msra.mxu0 0.0
      %792 = vmatpush.xpose.msra.mxu0 0.0
      %793 = vmatpush.xpose.msra.mxu0 0.0
      %794 = vmatpush.xpose.msra.mxu0 0.0
      %795 = vmatpush.xpose.msra.mxu0 %v779
      %796 = vmatpush.xpose.msra.mxu0 %v776
      %797 = vmatmul.f32.gmra.mxu0 %v776
      %v798 = vpop.f32.mrf.mxu0
      %v799 = vadd.f32 0.0, %v798
      %800 = vmatmul.f32.gmra.mxu0 %v779
      %v801 = vpop.f32.mrf.mxu0
      %v802 = vadd.f32 0.0, %v801
      %803 = vdwg.mxu0
      %v805 = vsel %vm358, %v758, 0
      %v808 = vsel %vm358, %v761, 0
      %810 = vmatpush.xpose.msra.mxu0 0.0
      %811 = vmatpush.xpose.msra.mxu0 0.0
      %812 = vmatpush.xpose.msra.mxu0 0.0
      %813 = vmatpush.xpose.msra.mxu0 0.0
      %814 = vmatpush.xpose.msra.mxu0 0.0
      %815 = vmatpush.xpose.msra.mxu0 0.0
      %816 = vmatpush.xpose.msra.mxu0 0.0
      %817 = vmatpush.xpose.msra.mxu0 0.0
      %818 = vmatpush.xpose.msra.mxu0 0.0
      %819 = vmatpush.xpose.msra.mxu0 0.0
      %820 = vmatpush.xpose.msra.mxu0 0.0
      %821 = vmatpush.xpose.msra.mxu0 0.0
      %822 = vmatpush.xpose.msra.mxu0 0.0
      %823 = vmatpush.xpose.msra.mxu0 0.0
      %824 = vmatpush.xpose.msra.mxu0 %v808
      %825 = vmatpush.xpose.msra.mxu0 %v805
      %826 = vmatmul.f32.gmra.mxu0 %v805
      %v827 = vpop.f32.mrf.mxu0
      %v828 = vadd.f32 0.0, %v827
      %829 = vmatmul.f32.gmra.mxu0 %v808
      %v830 = vpop.f32.mrf.mxu0
      %v831 = vadd.f32 0.0, %v830
      %832 = vdwg.mxu0
      %v834 = vsel %vm358, %v764, 0
      %v837 = vsel %vm358, %v767, 0
      %839 = vmatpush.xpose.msra.mxu0 0.0
      %840 = vmatpush.xpose.msra.mxu0 0.0
      %841 = vmatpush.xpose.msra.mxu0 0.0
      %842 = vmatpush.xpose.msra.mxu0 0.0
      %843 = vmatpush.xpose.msra.mxu0 0.0
      %844 = vmatpush.xpose.msra.mxu0 0.0
      %845 = vmatpush.xpose.msra.mxu0 0.0
      %846 = vmatpush.xpose.msra.mxu0 0.0
      %847 = vmatpush.xpose.msra.mxu0 0.0
      %848 = vmatpush.xpose.msra.mxu0 0.0
      %849 = vmatpush.xpose.msra.mxu0 0.0
      %850 = vmatpush.xpose.msra.mxu0 0.0
      %851 = vmatpush.xpose.msra.mxu0 0.0
      %852 = vmatpush.xpose.msra.mxu0 0.0
      %853 = vmatpush.xpose.msra.mxu0 %v837
      %854 = vmatpush.xpose.msra.mxu0 %v834
      %855 = vmatmul.f32.gmra.mxu0 %v834
      %v856 = vpop.f32.mrf.mxu0
      %v857 = vadd.f32 0.0, %v856
      %858 = vmatmul.f32.gmra.mxu0 %v837
      %v859 = vpop.f32.mrf.mxu0
      %v860 = vadd.f32 0.0, %v859
      %861 = vdwg.mxu0
      %v863 = vsel %vm358, %v770, 0
      %v866 = vsel %vm358, %v773, 0
      %868 = vmatpush.xpose.msra.mxu0 0.0
      %869 = vmatpush.xpose.msra.mxu0 0.0
      %870 = vmatpush.xpose.msra.mxu0 0.0
      %871 = vmatpush.xpose.msra.mxu0 0.0
      %872 = vmatpush.xpose.msra.mxu0 0.0
      %873 = vmatpush.xpose.msra.mxu0 0.0
      %874 = vmatpush.xpose.msra.mxu0 0.0
      %875 = vmatpush.xpose.msra.mxu0 0.0
      %876 = vmatpush.xpose.msra.mxu0 0.0
      %877 = vmatpush.xpose.msra.mxu0 0.0
      %878 = vmatpush.xpose.msra.mxu0 0.0
      %879 = vmatpush.xpose.msra.mxu0 0.0
      %880 = vmatpush.xpose.msra.mxu0 0.0
      %881 = vmatpush.xpose.msra.mxu0 0.0
      %882 = vmatpush.xpose.msra.mxu0 %v866
      %883 = vmatpush.xpose.msra.mxu0 %v863
      %884 = vmatmul.f32.gmra.mxu0 %v863
      %v885 = vpop.f32.mrf.mxu0
      %v886 = vadd.f32 0.0, %v885
      %887 = vmatmul.f32.gmra.mxu0 %v866
      %v888 = vpop.f32.mrf.mxu0
      %v889 = vadd.f32 0.0, %v888
      %890 = vdwg.mxu0
      %v891 = vmul.f32 %v799, 0.35355338
      %v892 = vmul.f32 %v802, 0.35355338
      %v893 = vmul.f32 %v828, 0.35355338
      %v894 = vmul.f32 %v831, 0.35355338
      %v895 = vmul.f32 %v857, 0.35355338
      %v896 = vmul.f32 %v860, 0.35355338
      %v897 = vmul.f32 %v886, 0.35355338
      %v898 = vmul.f32 %v889, 0.35355338
      %v899 = vsel %vm485, %v891, -65000.0
      %v900 = vsel %vm486, %v892, -65000.0
      %v901 = vsel %vm485, %v893, -65000.0
      %v902 = vsel %vm486, %v894, -65000.0
      %v903 = vsel %vm485, %v895, -65000.0
      %v904 = vsel %vm486, %v896, -65000.0
      %v905 = vsel %vm485, %v897, -65000.0
      %v906 = vsel %vm486, %v898, -65000.0
      %v907 = vsel %vm495, %v899, -inf
      %908 = vmax.xlane.f32.xlu0 %v907
      %v909 = vpop.xlane.xlu0 %908
      %v910 = vsel %vm495, %v900, -inf
      %911 = vmax.xlane.f32.xlu0 %v910
      %v912 = vpop.xlane.xlu0 %911
      %v913 = vsel %vm495, %v901, -inf
      %914 = vmax.xlane.f32.xlu0 %v913
      %v915 = vpop.xlane.xlu0 %914
      %v916 = vsel %vm495, %v902, -inf
      %917 = vmax.xlane.f32.xlu0 %v916
      %v918 = vpop.xlane.xlu0 %917
      %v919 = vsel %vm495, %v903, -inf
      %920 = vmax.xlane.f32.xlu0 %v919
      %v921 = vpop.xlane.xlu0 %920
      %v922 = vsel %vm495, %v904, -inf
      %923 = vmax.xlane.f32.xlu0 %v922
      %v924 = vpop.xlane.xlu0 %923
      %v925 = vsel %vm495, %v905, -inf
      %926 = vmax.xlane.f32.xlu0 %v925
      %v927 = vpop.xlane.xlu0 %926
      %v928 = vsel %vm495, %v906, -inf
      %929 = vmax.xlane.f32.xlu0 %v928
      %v930 = vpop.xlane.xlu0 %929
      %v931 = vsub.f32 %v899, %v909
      %v932 = vsub.f32 %v900, %v912
      %v933 = vsub.f32 %v901, %v915
      %v934 = vsub.f32 %v902, %v918
      %v935 = vsub.f32 %v903, %v921
      %v936 = vsub.f32 %v904, %v924
      %v937 = vsub.f32 %v905, %v927
      %v938 = vsub.f32 %v906, %v930
      %v939 = vmul.f32 %v931, 1.442695
      %v940 = vpow.pop %v939
      %v941 = vmul.f32 %v932, 1.442695
      %v942 = vpow.pop %v941
      %v943 = vmul.f32 %v933, 1.442695
      %v944 = vpow.pop %v943
      %v945 = vmul.f32 %v934, 1.442695
      %v946 = vpow.pop %v945
      %v947 = vmul.f32 %v935, 1.442695
      %v948 = vpow.pop %v947
      %v949 = vmul.f32 %v936, 1.442695
      %v950 = vpow.pop %v949
      %v951 = vmul.f32 %v937, 1.442695
      %v952 = vpow.pop %v951
      %v953 = vmul.f32 %v938, 1.442695
      %v954 = vpow.pop %v953
      %v955 = vsel %vm495, %v940, 0.0
      %956 = vadd.xlane.f32.xlu0 %v955
      %v957 = vpop.xlane.xlu0 %956
      %v958 = vsel %vm495, %v942, 0.0
      %959 = vadd.xlane.f32.xlu0 %v958
      %v960 = vpop.xlane.xlu0 %959
      %v961 = vsel %vm495, %v944, 0.0
      %962 = vadd.xlane.f32.xlu0 %v961
      %v963 = vpop.xlane.xlu0 %962
      %v964 = vsel %vm495, %v946, 0.0
      %965 = vadd.xlane.f32.xlu0 %v964
      %v966 = vpop.xlane.xlu0 %965
      %v967 = vsel %vm495, %v948, 0.0
      %968 = vadd.xlane.f32.xlu0 %v967
      %v969 = vpop.xlane.xlu0 %968
      %v970 = vsel %vm495, %v950, 0.0
      %971 = vadd.xlane.f32.xlu0 %v970
      %v972 = vpop.xlane.xlu0 %971
      %v973 = vsel %vm495, %v952, 0.0
      %974 = vadd.xlane.f32.xlu0 %v973
      %v975 = vpop.xlane.xlu0 %974
      %v976 = vsel %vm495, %v954, 0.0
      %977 = vadd.xlane.f32.xlu0 %v976
      %v978 = vpop.xlane.xlu0 %977
      %v979 = vrcp.pop %v957
      %v980 = vrcp.pop %v960
      %v981 = vrcp.pop %v963
      %v982 = vrcp.pop %v966
      %v983 = vrcp.pop %v969
      %v984 = vrcp.pop %v972
      %v985 = vrcp.pop %v975
      %v986 = vrcp.pop %v978
      %v987 = vmul.f32 %v940, %v979
      %v988 = vmul.f32 %v942, %v980
      %v989 = vmul.f32 %v944, %v981
      %v990 = vmul.f32 %v946, %v982
      %v991 = vmul.f32 %v948, %v983
      %v992 = vmul.f32 %v950, %v984
      %v993 = vmul.f32 %v952, %v985
      %v994 = vmul.f32 %v954, %v986
      %v996 = vsel %vm495, %v987, 0
      %v999 = vsel %vm495, %v988, 0
      %1001 = vmatpush.msra.mxu0 0.0
      %1002 = vmatpush.msra.mxu0 0.0
      %1003 = vmatpush.msra.mxu0 0.0
      %1004 = vmatpush.msra.mxu0 0.0
      %1005 = vmatpush.msra.mxu0 0.0
      %1006 = vmatpush.msra.mxu0 0.0
      %1007 = vmatpush.msra.mxu0 0.0
      %1008 = vmatpush.msra.mxu0 0.0
      %1009 = vmatpush.msra.mxu0 0.0
      %1010 = vmatpush.msra.mxu0 0.0
      %1011 = vmatpush.msra.mxu0 0.0
      %1012 = vmatpush.msra.mxu0 0.0
      %1013 = vmatpush.msra.mxu0 0.0
      %1014 = vmatpush.msra.mxu0 0.0
      %1015 = vmatpush.msra.mxu0 %v755
      %1016 = vmatpush.msra.mxu0 %v752
      %1017 = vmatmul.f32.gmra.mxu0 %v996
      %v1018 = vpop.f32.mrf.mxu0
      %v1019 = vadd.f32 0.0, %v1018
      %1020 = vmatmul.f32.gmra.mxu0 %v999
      %v1021 = vpop.f32.mrf.mxu0
      %v1022 = vadd.f32 0.0, %v1021
      %1023 = vdwg.mxu0
      %v1025 = vsel %vm495, %v989, 0
      %v1028 = vsel %vm495, %v990, 0
      %1030 = vmatpush.msra.mxu0 0.0
      %1031 = vmatpush.msra.mxu0 0.0
      %1032 = vmatpush.msra.mxu0 0.0
      %1033 = vmatpush.msra.mxu0 0.0
      %1034 = vmatpush.msra.mxu0 0.0
      %1035 = vmatpush.msra.mxu0 0.0
      %1036 = vmatpush.msra.mxu0 0.0
      %1037 = vmatpush.msra.mxu0 0.0
      %1038 = vmatpush.msra.mxu0 0.0
      %1039 = vmatpush.msra.mxu0 0.0
      %1040 = vmatpush.msra.mxu0 0.0
      %1041 = vmatpush.msra.mxu0 0.0
      %1042 = vmatpush.msra.mxu0 0.0
      %1043 = vmatpush.msra.mxu0 0.0
      %1044 = vmatpush.msra.mxu0 %v761
      %1045 = vmatpush.msra.mxu0 %v758
      %1046 = vmatmul.f32.gmra.mxu0 %v1025
      %v1047 = vpop.f32.mrf.mxu0
      %v1048 = vadd.f32 0.0, %v1047
      %1049 = vmatmul.f32.gmra.mxu0 %v1028
      %v1050 = vpop.f32.mrf.mxu0
      %v1051 = vadd.f32 0.0, %v1050
      %1052 = vdwg.mxu0
      %v1054 = vsel %vm495, %v991, 0
      %v1057 = vsel %vm495, %v992, 0
      %1059 = vmatpush.msra.mxu0 0.0
      %1060 = vmatpush.msra.mxu0 0.0
      %1061 = vmatpush.msra.mxu0 0.0
      %1062 = vmatpush.msra.mxu0 0.0
      %1063 = vmatpush.msra.mxu0 0.0
      %1064 = vmatpush.msra.mxu0 0.0
      %1065 = vmatpush.msra.mxu0 0.0
      %1066 = vmatpush.msra.mxu0 0.0
      %1067 = vmatpush.msra.mxu0 0.0
      %1068 = vmatpush.msra.mxu0 0.0
      %1069 = vmatpush.msra.mxu0 0.0
      %1070 = vmatpush.msra.mxu0 0.0
      %1071 = vmatpush.msra.mxu0 0.0
      %1072 = vmatpush.msra.mxu0 0.0
      %1073 = vmatpush.msra.mxu0 %v767
      %1074 = vmatpush.msra.mxu0 %v764
      %1075 = vmatmul.f32.gmra.mxu0 %v1054
      %v1076 = vpop.f32.mrf.mxu0
      %v1077 = vadd.f32 0.0, %v1076
      %1078 = vmatmul.f32.gmra.mxu0 %v1057
      %v1079 = vpop.f32.mrf.mxu0
      %v1080 = vadd.f32 0.0, %v1079
      %1081 = vdwg.mxu0
      %v1083 = vsel %vm495, %v993, 0
      %v1086 = vsel %vm495, %v994, 0
      %1088 = vmatpush.msra.mxu0 0.0
      %1089 = vmatpush.msra.mxu0 0.0
      %1090 = vmatpush.msra.mxu0 0.0
      %1091 = vmatpush.msra.mxu0 0.0
      %1092 = vmatpush.msra.mxu0 0.0
      %1093 = vmatpush.msra.mxu0 0.0
      %1094 = vmatpush.msra.mxu0 0.0
      %1095 = vmatpush.msra.mxu0 0.0
      %1096 = vmatpush.msra.mxu0 0.0
      %1097 = vmatpush.msra.mxu0 0.0
      %1098 = vmatpush.msra.mxu0 0.0
      %1099 = vmatpush.msra.mxu0 0.0
      %1100 = vmatpush.msra.mxu0 0.0
      %1101 = vmatpush.msra.mxu0 0.0
      %1102 = vmatpush.msra.mxu0 %v773
      %1103 = vmatpush.msra.mxu0 %v770
      %1104 = vmatmul.f32.gmra.mxu0 %v1083
      %v1105 = vpop.f32.mrf.mxu0
      %v1106 = vadd.f32 0.0, %v1105
      %1107 = vmatmul.f32.gmra.mxu0 %v1086
      %v1108 = vpop.f32.mrf.mxu0
      %v1109 = vadd.f32 0.0, %v1108
      %1110 = vdwg.mxu0
      %v1111 = vsel %vm358, %v1019, 0.0
      %v1112 = vsel %vm358, %v1048, 0.0
      %v1113 = vadd.f32 %v1111, %v1112
      %v1114 = vsel %vm358, %v1077, 0.0
      %v1115 = vadd.f32 %v1113, %v1114
      %v1116 = vsel %vm358, %v1106, 0.0
      %v1117 = vadd.f32 %v1115, %v1116
      %v1118 = vsel %vm358, %v1022, 0.0
      %v1119 = vsel %vm358, %v1051, 0.0
      %v1120 = vadd.f32 %v1118, %v1119
      %v1121 = vsel %vm358, %v1080, 0.0
      %v1122 = vadd.f32 %v1120, %v1121
      %v1123 = vsel %vm358, %v1109, 0.0
      %v1124 = vadd.f32 %v1122, %v1123
      %v1125 = vmul.f32 %v1117, %v720
      %v1126 = vmul.f32 %v1124, %v720
      %s1127 = scalar_lea.vmem %s4, 8
      %v1128 = vld [vmem:[%s1127] sm:$0xff]
      %v1130 = vsel %vm358, %v1125, 0
      %v1133 = vsel %vm358, %v1126, 0
      %1135 = vmatpush.msra.mxu0 0.0
      %1136 = vmatpush.msra.mxu0 0.0
      %1137 = vmatpush.msra.mxu0 0.0
      %1138 = vmatpush.msra.mxu0 0.0
      %1139 = vmatpush.msra.mxu0 0.0
      %1140 = vmatpush.msra.mxu0 0.0
      %1141 = vmatpush.msra.mxu0 0.0
      %1142 = vmatpush.msra.mxu0 0.0
      %1143 = vmatpush.msra.mxu0 0.0
      %1144 = vmatpush.msra.mxu0 0.0
      %1145 = vmatpush.msra.mxu0 0.0
      %1146 = vmatpush.msra.mxu0 0.0
      %1147 = vmatpush.msra.mxu0 0.0
      %1148 = vmatpush.msra.mxu0 0.0
      %1149 = vmatpush.msra.mxu0 0.0
      %1150 = vmatpush.msra.mxu0 %v1128
      %1151 = vmatmul.f32.gmra.mxu0 %v1130
      %v1152 = vpop.f32.mrf.mxu0
      %v1153 = vadd.f32 0.0, %v1152
      %1154 = vmatmul.f32.gmra.mxu0 %v1133
      %v1155 = vpop.f32.mrf.mxu0
      %v1156 = vadd.f32 0.0, %v1155
      %1157 = vdwg.mxu0
      %v1159 = vsel %vm358, %v721, 0
      %v1162 = vsel %vm358, %v722, 0
      %1164 = vmatpush.msra.mxu0 0.0
      %1165 = vmatpush.msra.mxu0 0.0
      %1166 = vmatpush.msra.mxu0 0.0
      %1167 = vmatpush.msra.mxu0 0.0
      %1168 = vmatpush.msra.mxu0 0.0
      %1169 = vmatpush.msra.mxu0 0.0
      %1170 = vmatpush.msra.mxu0 0.0
      %1171 = vmatpush.msra.mxu0 0.0
      %1172 = vmatpush.msra.mxu0 0.0
      %1173 = vmatpush.msra.mxu0 0.0
      %1174 = vmatpush.msra.mxu0 0.0
      %1175 = vmatpush.msra.mxu0 0.0
      %1176 = vmatpush.msra.mxu0 0.0
      %1177 = vmatpush.msra.mxu0 0.0
      %1178 = vmatpush.msra.mxu0 0.0
      %1179 = vmatpush.msra.mxu0 %v723
      %1180 = vmatmul.f32.gmra.mxu0 %v1159
      %v1181 = vpop.f32.mrf.mxu0
      %v1182 = vadd.f32 %v1153, %v1181
      %1183 = vmatmul.f32.gmra.mxu0 %v1162
      %v1184 = vpop.f32.mrf.mxu0
      %v1185 = vadd.f32 %v1156, %v1184
      %1186 = vdwg.mxu0
      %s1187 = scalar_lea.vmem %s2, 64
      %v1188 = vld [vmem:[%s1187] sm:$0xff]
      %v1189 = vld [vmem:[%s1187 + $0x8] sm:$0xff]
      %v1190 = vld [vmem:[%s1187 + $0x10] sm:$0xff]
      %v1191 = vld [vmem:[%s1187 + $0x18] sm:$0xff]
      %s1192 = scalar_lea.vmem %s3, 2
      %v1193 = vld [vmem:[%s1192] sm:$0x1]
      %v1195 = vperm.slane %v1193, 0
      %1197 = vmatpush.msra.mxu0 0.0
      %1198 = vmatpush.msra.mxu0 0.0
      %1199 = vmatpush.msra.mxu0 0.0
      %1200 = vmatpush.msra.mxu0 0.0
      %1201 = vmatpush.msra.mxu0 0.0
      %1202 = vmatpush.msra.mxu0 0.0
      %1203 = vmatpush.msra.mxu0 0.0
      %1204 = vmatpush.msra.mxu0 0.0
      %1205 = vmatpush.msra.mxu0 0.0
      %1206 = vmatpush.msra.mxu0 0.0
      %1207 = vmatpush.msra.mxu0 0.0
      %1208 = vmatpush.msra.mxu0 0.0
      %1209 = vmatpush.msra.mxu0 %v1191
      %1210 = vmatpush.msra.mxu0 %v1190
      %1211 = vmatpush.msra.mxu0 %v1189
      %1212 = vmatpush.msra.mxu0 %v1188
      %1213 = vmatmul.f32.gmra.mxu0 %v294
      %v1214 = vpop.f32.mrf.mxu0
      %v1215 = vadd.f32 %v1195, %v1214
      %1216 = vmatmul.f32.gmra.mxu0 %v297
      %v1217 = vpop.f32.mrf.mxu0
      %v1218 = vadd.f32 %v1195, %v1217
      %1219 = vmatmul.f32.gmra.mxu0 %v300
      %v1220 = vpop.f32.mrf.mxu0
      %v1221 = vadd.f32 %v1195, %v1220
      %1222 = vmatmul.f32.gmra.mxu0 %v303
      %v1223 = vpop.f32.mrf.mxu0
      %v1224 = vadd.f32 %v1195, %v1223
      %1225 = vmatmul.f32.gmra.mxu0 %v306
      %v1226 = vpop.f32.mrf.mxu0
      %v1227 = vadd.f32 %v1195, %v1226
      %1228 = vmatmul.f32.gmra.mxu0 %v309
      %v1229 = vpop.f32.mrf.mxu0
      %v1230 = vadd.f32 %v1195, %v1229
      %1231 = vmatmul.f32.gmra.mxu0 %v312
      %v1232 = vpop.f32.mrf.mxu0
      %v1233 = vadd.f32 %v1195, %v1232
      %1234 = vmatmul.f32.gmra.mxu0 %v315
      %v1235 = vpop.f32.mrf.mxu0
      %v1236 = vadd.f32 %v1195, %v1235
      %1237 = vdwg.mxu0
      %v1239 = vsel %vm358, %v1215, 0
      %v1242 = vsel %vm358, %v1218, 0
      %1244 = vmatpush.xpose.msra.mxu0 0.0
      %1245 = vmatpush.xpose.msra.mxu0 0.0
      %1246 = vmatpush.xpose.msra.mxu0 0.0
      %1247 = vmatpush.xpose.msra.mxu0 0.0
      %1248 = vmatpush.xpose.msra.mxu0 0.0
      %1249 = vmatpush.xpose.msra.mxu0 0.0
      %1250 = vmatpush.xpose.msra.mxu0 0.0
      %1251 = vmatpush.xpose.msra.mxu0 0.0
      %1252 = vmatpush.xpose.msra.mxu0 0.0
      %1253 = vmatpush.xpose.msra.mxu0 0.0
      %1254 = vmatpush.xpose.msra.mxu0 0.0
      %1255 = vmatpush.xpose.msra.mxu0 0.0
      %1256 = vmatpush.xpose.msra.mxu0 0.0
      %1257 = vmatpush.xpose.msra.mxu0 0.0
      %1258 = vmatpush.xpose.msra.mxu0 %v1242
      %1259 = vmatpush.xpose.msra.mxu0 %v1239
      %1260 = vmatmul.f32.gmra.mxu0 %v1239
      %v1261 = vpop.f32.mrf.mxu0
      %v1262 = vadd.f32 0.0, %v1261
      %1263 = vmatmul.f32.gmra.mxu0 %v1242
      %v1264 = vpop.f32.mrf.mxu0
      %v1265 = vadd.f32 0.0, %v1264
      %1266 = vdwg.mxu0
      %v1268 = vsel %vm358, %v1221, 0
      %v1271 = vsel %vm358, %v1224, 0
      %1273 = vmatpush.xpose.msra.mxu0 0.0
      %1274 = vmatpush.xpose.msra.mxu0 0.0
      %1275 = vmatpush.xpose.msra.mxu0 0.0
      %1276 = vmatpush.xpose.msra.mxu0 0.0
      %1277 = vmatpush.xpose.msra.mxu0 0.0
      %1278 = vmatpush.xpose.msra.mxu0 0.0
      %1279 = vmatpush.xpose.msra.mxu0 0.0
      %1280 = vmatpush.xpose.msra.mxu0 0.0
      %1281 = vmatpush.xpose.msra.mxu0 0.0
      %1282 = vmatpush.xpose.msra.mxu0 0.0
      %1283 = vmatpush.xpose.msra.mxu0 0.0
      %1284 = vmatpush.xpose.msra.mxu0 0.0
      %1285 = vmatpush.xpose.msra.mxu0 0.0
      %1286 = vmatpush.xpose.msra.mxu0 0.0
      %1287 = vmatpush.xpose.msra.mxu0 %v1271
      %1288 = vmatpush.xpose.msra.mxu0 %v1268
      %1289 = vmatmul.f32.gmra.mxu0 %v1268
      %v1290 = vpop.f32.mrf.mxu0
      %v1291 = vadd.f32 0.0, %v1290
      %1292 = vmatmul.f32.gmra.mxu0 %v1271
      %v1293 = vpop.f32.mrf.mxu0
      %v1294 = vadd.f32 0.0, %v1293
      %1295 = vdwg.mxu0
      %v1297 = vsel %vm358, %v1227, 0
      %v1300 = vsel %vm358, %v1230, 0
      %1302 = vmatpush.xpose.msra.mxu0 0.0
      %1303 = vmatpush.xpose.msra.mxu0 0.0
      %1304 = vmatpush.xpose.msra.mxu0 0.0
      %1305 = vmatpush.xpose.msra.mxu0 0.0
      %1306 = vmatpush.xpose.msra.mxu0 0.0
      %1307 = vmatpush.xpose.msra.mxu0 0.0
      %1308 = vmatpush.xpose.msra.mxu0 0.0
      %1309 = vmatpush.xpose.msra.mxu0 0.0
      %1310 = vmatpush.xpose.msra.mxu0 0.0
      %1311 = vmatpush.xpose.msra.mxu0 0.0
      %1312 = vmatpush.xpose.msra.mxu0 0.0
      %1313 = vmatpush.xpose.msra.mxu0 0.0
      %1314 = vmatpush.xpose.msra.mxu0 0.0
      %1315 = vmatpush.xpose.msra.mxu0 0.0
      %1316 = vmatpush.xpose.msra.mxu0 %v1300
      %1317 = vmatpush.xpose.msra.mxu0 %v1297
      %1318 = vmatmul.f32.gmra.mxu0 %v1297
      %v1319 = vpop.f32.mrf.mxu0
      %v1320 = vadd.f32 0.0, %v1319
      %1321 = vmatmul.f32.gmra.mxu0 %v1300
      %v1322 = vpop.f32.mrf.mxu0
      %v1323 = vadd.f32 0.0, %v1322
      %1324 = vdwg.mxu0
      %v1326 = vsel %vm358, %v1233, 0
      %v1329 = vsel %vm358, %v1236, 0
      %1331 = vmatpush.xpose.msra.mxu0 0.0
      %1332 = vmatpush.xpose.msra.mxu0 0.0
      %1333 = vmatpush.xpose.msra.mxu0 0.0
      %1334 = vmatpush.xpose.msra.mxu0 0.0
      %1335 = vmatpush.xpose.msra.mxu0 0.0
      %1336 = vmatpush.xpose.msra.mxu0 0.0
      %1337 = vmatpush.xpose.msra.mxu0 0.0
      %1338 = vmatpush.xpose.msra.mxu0 0.0
      %1339 = vmatpush.xpose.msra.mxu0 0.0
      %1340 = vmatpush.xpose.msra.mxu0 0.0
      %1341 = vmatpush.xpose.msra.mxu0 0.0
      %1342 = vmatpush.xpose.msra.mxu0 0.0
      %1343 = vmatpush.xpose.msra.mxu0 0.0
      %1344 = vmatpush.xpose.msra.mxu0 0.0
      %1345 = vmatpush.xpose.msra.mxu0 %v1329
      %1346 = vmatpush.xpose.msra.mxu0 %v1326
      %1347 = vmatmul.f32.gmra.mxu0 %v1326
      %v1348 = vpop.f32.mrf.mxu0
      %v1349 = vadd.f32 0.0, %v1348
      %1350 = vmatmul.f32.gmra.mxu0 %v1329
      %v1351 = vpop.f32.mrf.mxu0
      %v1352 = vadd.f32 0.0, %v1351
      %1353 = vdwg.mxu0
      %v1354 = vmul.f32 %v1262, 0.35355338
      %v1355 = vmul.f32 %v1265, 0.35355338
      %v1356 = vmul.f32 %v1291, 0.35355338
      %v1357 = vmul.f32 %v1294, 0.35355338
      %v1358 = vmul.f32 %v1320, 0.35355338
      %v1359 = vmul.f32 %v1323, 0.35355338
      %v1360 = vmul.f32 %v1349, 0.35355338
      %v1361 = vmul.f32 %v1352, 0.35355338
      %v1362 = vsel %vm485, %v1354, -65000.0
      %v1363 = vsel %vm486, %v1355, -65000.0
      %v1364 = vsel %vm485, %v1356, -65000.0
      %v1365 = vsel %vm486, %v1357, -65000.0
      %v1366 = vsel %vm485, %v1358, -65000.0
      %v1367 = vsel %vm486, %v1359, -65000.0
      %v1368 = vsel %vm485, %v1360, -65000.0
      %v1369 = vsel %vm486, %v1361, -65000.0
      %v1370 = vsel %vm495, %v1362, -inf
      %1371 = vmax.xlane.f32.xlu0 %v1370
      %v1372 = vpop.xlane.xlu0 %1371
      %v1373 = vsel %vm495, %v1363, -inf
      %1374 = vmax.xlane.f32.xlu0 %v1373
      %v1375 = vpop.xlane.xlu0 %1374
      %v1376 = vsel %vm495, %v1364, -inf
      %1377 = vmax.xlane.f32.xlu0 %v1376
      %v1378 = vpop.xlane.xlu0 %1377
      %v1379 = vsel %vm495, %v1365, -inf
      %1380 = vmax.xlane.f32.xlu0 %v1379
      %v1381 = vpop.xlane.xlu0 %1380
      %v1382 = vsel %vm495, %v1366, -inf
      %1383 = vmax.xlane.f32.xlu0 %v1382
      %v1384 = vpop.xlane.xlu0 %1383
      %v1385 = vsel %vm495, %v1367, -inf
      %1386 = vmax.xlane.f32.xlu0 %v1385
      %v1387 = vpop.xlane.xlu0 %1386
      %v1388 = vsel %vm495, %v1368, -inf
      %1389 = vmax.xlane.f32.xlu0 %v1388
      %v1390 = vpop.xlane.xlu0 %1389
      %v1391 = vsel %vm495, %v1369, -inf
      %1392 = vmax.xlane.f32.xlu0 %v1391
      %v1393 = vpop.xlane.xlu0 %1392
      %v1394 = vsub.f32 %v1362, %v1372
      %v1395 = vsub.f32 %v1363, %v1375
      %v1396 = vsub.f32 %v1364, %v1378
      %v1397 = vsub.f32 %v1365, %v1381
      %v1398 = vsub.f32 %v1366, %v1384
      %v1399 = vsub.f32 %v1367, %v1387
      %v1400 = vsub.f32 %v1368, %v1390
      %v1401 = vsub.f32 %v1369, %v1393
      %v1402 = vmul.f32 %v1394, 1.442695
      %v1403 = vpow.pop %v1402
      %v1404 = vmul.f32 %v1395, 1.442695
      %v1405 = vpow.pop %v1404
      %v1406 = vmul.f32 %v1396, 1.442695
      %v1407 = vpow.pop %v1406
      %v1408 = vmul.f32 %v1397, 1.442695
      %v1409 = vpow.pop %v1408
      %v1410 = vmul.f32 %v1398, 1.442695
      %v1411 = vpow.pop %v1410
      %v1412 = vmul.f32 %v1399, 1.442695
      %v1413 = vpow.pop %v1412
      %v1414 = vmul.f32 %v1400, 1.442695
      %v1415 = vpow.pop %v1414
      %v1416 = vmul.f32 %v1401, 1.442695
      %v1417 = vpow.pop %v1416
      %v1418 = vsel %vm495, %v1403, 0.0
      %1419 = vadd.xlane.f32.xlu0 %v1418
      %v1420 = vpop.xlane.xlu0 %1419
      %v1421 = vsel %vm495, %v1405, 0.0
      %1422 = vadd.xlane.f32.xlu0 %v1421
      %v1423 = vpop.xlane.xlu0 %1422
      %v1424 = vsel %vm495, %v1407, 0.0
      %1425 = vadd.xlane.f32.xlu0 %v1424
      %v1426 = vpop.xlane.xlu0 %1425
      %v1427 = vsel %vm495, %v1409, 0.0
      %1428 = vadd.xlane.f32.xlu0 %v1427
      %v1429 = vpop.xlane.xlu0 %1428
      %v1430 = vsel %vm495, %v1411, 0.0
      %1431 = vadd.xlane.f32.xlu0 %v1430
      %v1432 = vpop.xlane.xlu0 %1431
      %v1433 = vsel %vm495, %v1413, 0.0
      %1434 = vadd.xlane.f32.xlu0 %v1433
      %v1435 = vpop.xlane.xlu0 %1434
      %v1436 = vsel %vm495, %v1415, 0.0
      %1437 = vadd.xlane.f32.xlu0 %v1436
      %v1438 = vpop.xlane.xlu0 %1437
      %v1439 = vsel %vm495, %v1417, 0.0
      %1440 = vadd.xlane.f32.xlu0 %v1439
      %v1441 = vpop.xlane.xlu0 %1440
      %v1442 = vrcp.pop %v1420
      %v1443 = vrcp.pop %v1423
      %v1444 = vrcp.pop %v1426
      %v1445 = vrcp.pop %v1429
      %v1446 = vrcp.pop %v1432
      %v1447 = vrcp.pop %v1435
      %v1448 = vrcp.pop %v1438
      %v1449 = vrcp.pop %v1441
      %v1450 = vmul.f32 %v1403, %v1442
      %v1451 = vmul.f32 %v1405, %v1443
      %v1452 = vmul.f32 %v1407, %v1444
      %v1453 = vmul.f32 %v1409, %v1445
      %v1454 = vmul.f32 %v1411, %v1446
      %v1455 = vmul.f32 %v1413, %v1447
      %v1456 = vmul.f32 %v1415, %v1448
      %v1457 = vmul.f32 %v1417, %v1449
      %v1459 = vsel %vm495, %v1450, 0
      %v1462 = vsel %vm495, %v1451, 0
      %1464 = vmatpush.msra.mxu0 0.0
      %1465 = vmatpush.msra.mxu0 0.0
      %1466 = vmatpush.msra.mxu0 0.0
      %1467 = vmatpush.msra.mxu0 0.0
      %1468 = vmatpush.msra.mxu0 0.0
      %1469 = vmatpush.msra.mxu0 0.0
      %1470 = vmatpush.msra.mxu0 0.0
      %1471 = vmatpush.msra.mxu0 0.0
      %1472 = vmatpush.msra.mxu0 0.0
      %1473 = vmatpush.msra.mxu0 0.0
      %1474 = vmatpush.msra.mxu0 0.0
      %1475 = vmatpush.msra.mxu0 0.0
      %1476 = vmatpush.msra.mxu0 0.0
      %1477 = vmatpush.msra.mxu0 0.0
      %1478 = vmatpush.msra.mxu0 %v1218
      %1479 = vmatpush.msra.mxu0 %v1215
      %1480 = vmatmul.f32.gmra.mxu0 %v1459
      %v1481 = vpop.f32.mrf.mxu0
      %v1482 = vadd.f32 0.0, %v1481
      %1483 = vmatmul.f32.gmra.mxu0 %v1462
      %v1484 = vpop.f32.mrf.mxu0
      %v1485 = vadd.f32 0.0, %v1484
      %1486 = vdwg.mxu0
      %v1488 = vsel %vm495, %v1452, 0
      %v1491 = vsel %vm495, %v1453, 0
      %1493 = vmatpush.msra.mxu0 0.0
      %1494 = vmatpush.msra.mxu0 0.0
      %1495 = vmatpush.msra.mxu0 0.0
      %1496 = vmatpush.msra.mxu0 0.0
      %1497 = vmatpush.msra.mxu0 0.0
      %1498 = vmatpush.msra.mxu0 0.0
      %1499 = vmatpush.msra.mxu0 0.0
      %1500 = vmatpush.msra.mxu0 0.0
      %1501 = vmatpush.msra.mxu0 0.0
      %1502 = vmatpush.msra.mxu0 0.0
      %1503 = vmatpush.msra.mxu0 0.0
      %1504 = vmatpush.msra.mxu0 0.0
      %1505 = vmatpush.msra.mxu0 0.0
      %1506 = vmatpush.msra.mxu0 0.0
      %1507 = vmatpush.msra.mxu0 %v1224
      %1508 = vmatpush.msra.mxu0 %v1221
      %1509 = vmatmul.f32.gmra.mxu0 %v1488
      %v1510 = vpop.f32.mrf.mxu0
      %v1511 = vadd.f32 0.0, %v1510
      %1512 = vmatmul.f32.gmra.mxu0 %v1491
      %v1513 = vpop.f32.mrf.mxu0
      %v1514 = vadd.f32 0.0, %v1513
      %1515 = vdwg.mxu0
      %v1517 = vsel %vm495, %v1454, 0
      %v1520 = vsel %vm495, %v1455, 0
      %1522 = vmatpush.msra.mxu0 0.0
      %1523 = vmatpush.msra.mxu0 0.0
      %1524 = vmatpush.msra.mxu0 0.0
      %1525 = vmatpush.msra.mxu0 0.0
      %1526 = vmatpush.msra.mxu0 0.0
      %1527 = vmatpush.msra.mxu0 0.0
      %1528 = vmatpush.msra.mxu0 0.0
      %1529 = vmatpush.msra.mxu0 0.0
      %1530 = vmatpush.msra.mxu0 0.0
      %1531 = vmatpush.msra.mxu0 0.0
      %1532 = vmatpush.msra.mxu0 0.0
      %1533 = vmatpush.msra.mxu0 0.0
      %1534 = vmatpush.msra.mxu0 0.0
      %1535 = vmatpush.msra.mxu0 0.0
      %1536 = vmatpush.msra.mxu0 %v1230
      %1537 = vmatpush.msra.mxu0 %v1227
      %1538 = vmatmul.f32.gmra.mxu0 %v1517
      %v1539 = vpop.f32.mrf.mxu0
      %v1540 = vadd.f32 0.0, %v1539
      %1541 = vmatmul.f32.gmra.mxu0 %v1520
      %v1542 = vpop.f32.mrf.mxu0
      %v1543 = vadd.f32 0.0, %v1542
      %1544 = vdwg.mxu0
      %v1546 = vsel %vm495, %v1456, 0
      %v1549 = vsel %vm495, %v1457, 0
      %1551 = vmatpush.msra.mxu0 0.0
      %1552 = vmatpush.msra.mxu0 0.0
      %1553 = vmatpush.msra.mxu0 0.0
      %1554 = vmatpush.msra.mxu0 0.0
      %1555 = vmatpush.msra.mxu0 0.0
      %1556 = vmatpush.msra.mxu0 0.0
      %1557 = vmatpush.msra.mxu0 0.0
      %1558 = vmatpush.msra.mxu0 0.0
      %1559 = vmatpush.msra.mxu0 0.0
      %1560 = vmatpush.msra.mxu0 0.0
      %1561 = vmatpush.msra.mxu0 0.0
      %1562 = vmatpush.msra.mxu0 0.0
      %1563 = vmatpush.msra.mxu0 0.0
      %1564 = vmatpush.msra.mxu0 0.0
      %1565 = vmatpush.msra.mxu0 %v1236
      %1566 = vmatpush.msra.mxu0 %v1233
      %1567 = vmatmul.f32.gmra.mxu0 %v1546
      %v1568 = vpop.f32.mrf.mxu0
      %v1569 = vadd.f32 0.0, %v1568
      %1570 = vmatmul.f32.gmra.mxu0 %v1549
      %v1571 = vpop.f32.mrf.mxu0
      %v1572 = vadd.f32 0.0, %v1571
      %1573 = vdwg.mxu0
      %v1574 = vsel %vm358, %v1482, 0.0
      %v1575 = vsel %vm358, %v1511, 0.0
      %v1576 = vadd.f32 %v1574, %v1575
      %v1577 = vsel %vm358, %v1540, 0.0
      %v1578 = vadd.f32 %v1576, %v1577
      %v1579 = vsel %vm358, %v1569, 0.0
      %v1580 = vadd.f32 %v1578, %v1579
      %v1581 = vsel %vm358, %v1485, 0.0
      %v1582 = vsel %vm358, %v1514, 0.0
      %v1583 = vadd.f32 %v1581, %v1582
      %v1584 = vsel %vm358, %v1543, 0.0
      %v1585 = vadd.f32 %v1583, %v1584
      %v1586 = vsel %vm358, %v1572, 0.0
      %v1587 = vadd.f32 %v1585, %v1586
      %v1588 = vmul.f32 %v1580, %v720
      %v1589 = vmul.f32 %v1587, %v720
      %s1590 = scalar_lea.vmem %s4, 16
      %v1591 = vld [vmem:[%s1590] sm:$0xff]
      %v1593 = vsel %vm358, %v1588, 0
      %v1596 = vsel %vm358, %v1589, 0
      %1598 = vmatpush.msra.mxu0 0.0
      %1599 = vmatpush.msra.mxu0 0.0
      %1600 = vmatpush.msra.mxu0 0.0
      %1601 = vmatpush.msra.mxu0 0.0
      %1602 = vmatpush.msra.mxu0 0.0
      %1603 = vmatpush.msra.mxu0 0.0
      %1604 = vmatpush.msra.mxu0 0.0
      %1605 = vmatpush.msra.mxu0 0.0
      %1606 = vmatpush.msra.mxu0 0.0
      %1607 = vmatpush.msra.mxu0 0.0
      %1608 = vmatpush.msra.mxu0 0.0
      %1609 = vmatpush.msra.mxu0 0.0
      %1610 = vmatpush.msra.mxu0 0.0
      %1611 = vmatpush.msra.mxu0 0.0
      %1612 = vmatpush.msra.mxu0 0.0
      %1613 = vmatpush.msra.mxu0 %v1591
      %1614 = vmatmul.f32.gmra.mxu0 %v1593
      %v1615 = vpop.f32.mrf.mxu0
      %v1616 = vadd.f32 0.0, %v1615
      %1617 = vmatmul.f32.gmra.mxu0 %v1596
      %v1618 = vpop.f32.mrf.mxu0
      %v1619 = vadd.f32 0.0, %v1618
      %1620 = vdwg.mxu0
      %v1621 = vadd.f32 %v1182, %v1616
      %v1622 = vadd.f32 %v1185, %v1619
      %s1623 = scalar_lea.vmem %s2, 96
      %v1624 = vld [vmem:[%s1623] sm:$0xff]
      %v1625 = vld [vmem:[%s1623 + $0x8] sm:$0xff]
      %v1626 = vld [vmem:[%s1623 + $0x10] sm:$0xff]
      %v1627 = vld [vmem:[%s1623 + $0x18] sm:$0xff]
      %s1628 = scalar_lea.vmem %s3, 3
      %v1629 = vld [vmem:[%s1628] sm:$0x1]
      %v1631 = vperm.slane %v1629, 0
      %1633 = vmatpush.msra.mxu0 0.0
      %1634 = vmatpush.msra.mxu0 0.0
      %1635 = vmatpush.msra.mxu0 0.0
      %1636 = vmatpush.msra.mxu0 0.0
      %1637 = vmatpush.msra.mxu0 0.0
      %1638 = vmatpush.msra.mxu0 0.0
      %1639 = vmatpush.msra.mxu0 0.0
      %1640 = vmatpush.msra.mxu0 0.0
      %1641 = vmatpush.msra.mxu0 0.0
      %1642 = vmatpush.msra.mxu0 0.0
      %1643 = vmatpush.msra.mxu0 0.0
      %1644 = vmatpush.msra.mxu0 0.0
      %1645 = vmatpush.msra.mxu0 %v1627
      %1646 = vmatpush.msra.mxu0 %v1626
      %1647 = vmatpush.msra.mxu0 %v1625
      %1648 = vmatpush.msra.mxu0 %v1624
      %1649 = vmatmul.f32.gmra.mxu0 %v294
      %v1650 = vpop.f32.mrf.mxu0
      %v1651 = vadd.f32 %v1631, %v1650
      %1652 = vmatmul.f32.gmra.mxu0 %v297
      %v1653 = vpop.f32.mrf.mxu0
      %v1654 = vadd.f32 %v1631, %v1653
      %1655 = vmatmul.f32.gmra.mxu0 %v300
      %v1656 = vpop.f32.mrf.mxu0
      %v1657 = vadd.f32 %v1631, %v1656
      %1658 = vmatmul.f32.gmra.mxu0 %v303
      %v1659 = vpop.f32.mrf.mxu0
      %v1660 = vadd.f32 %v1631, %v1659
      %1661 = vmatmul.f32.gmra.mxu0 %v306
      %v1662 = vpop.f32.mrf.mxu0
      %v1663 = vadd.f32 %v1631, %v1662
      %1664 = vmatmul.f32.gmra.mxu0 %v309
      %v1665 = vpop.f32.mrf.mxu0
      %v1666 = vadd.f32 %v1631, %v1665
      %1667 = vmatmul.f32.gmra.mxu0 %v312
      %v1668 = vpop.f32.mrf.mxu0
      %v1669 = vadd.f32 %v1631, %v1668
      %1670 = vmatmul.f32.gmra.mxu0 %v315
      %v1671 = vpop.f32.mrf.mxu0
      %v1672 = vadd.f32 %v1631, %v1671
      %1673 = vdwg.mxu0
      %v1675 = vsel %vm358, %v1651, 0
      %v1678 = vsel %vm358, %v1654, 0
      %1680 = vmatpush.xpose.msra.mxu0 0.0
      %1681 = vmatpush.xpose.msra.mxu0 0.0
      %1682 = vmatpush.xpose.msra.mxu0 0.0
      %1683 = vmatpush.xpose.msra.mxu0 0.0
      %1684 = vmatpush.xpose.msra.mxu0 0.0
      %1685 = vmatpush.xpose.msra.mxu0 0.0
      %1686 = vmatpush.xpose.msra.mxu0 0.0
      %1687 = vmatpush.xpose.msra.mxu0 0.0
      %1688 = vmatpush.xpose.msra.mxu0 0.0
      %1689 = vmatpush.xpose.msra.mxu0 0.0
      %1690 = vmatpush.xpose.msra.mxu0 0.0
      %1691 = vmatpush.xpose.msra.mxu0 0.0
      %1692 = vmatpush.xpose.msra.mxu0 0.0
      %1693 = vmatpush.xpose.msra.mxu0 0.0
      %1694 = vmatpush.xpose.msra.mxu0 %v1678
      %1695 = vmatpush.xpose.msra.mxu0 %v1675
      %1696 = vmatmul.f32.gmra.mxu0 %v1675
      %v1697 = vpop.f32.mrf.mxu0
      %v1698 = vadd.f32 0.0, %v1697
      %1699 = vmatmul.f32.gmra.mxu0 %v1678
      %v1700 = vpop.f32.mrf.mxu0
      %v1701 = vadd.f32 0.0, %v1700
      %1702 = vdwg.mxu0
      %v1704 = vsel %vm358, %v1657, 0
      %v1707 = vsel %vm358, %v1660, 0
      %1709 = vmatpush.xpose.msra.mxu0 0.0
      %1710 = vmatpush.xpose.msra.mxu0 0.0
      %1711 = vmatpush.xpose.msra.mxu0 0.0
      %1712 = vmatpush.xpose.msra.mxu0 0.0
      %1713 = vmatpush.xpose.msra.mxu0 0.0
      %1714 = vmatpush.xpose.msra.mxu0 0.0
      %1715 = vmatpush.xpose.msra.mxu0 0.0
      %1716 = vmatpush.xpose.msra.mxu0 0.0
      %1717 = vmatpush.xpose.msra.mxu0 0.0
      %1718 = vmatpush.xpose.msra.mxu0 0.0
      %1719 = vmatpush.xpose.msra.mxu0 0.0
      %1720 = vmatpush.xpose.msra.mxu0 0.0
      %1721 = vmatpush.xpose.msra.mxu0 0.0
      %1722 = vmatpush.xpose.msra.mxu0 0.0
      %1723 = vmatpush.xpose.msra.mxu0 %v1707
      %1724 = vmatpush.xpose.msra.mxu0 %v1704
      %1725 = vmatmul.f32.gmra.mxu0 %v1704
      %v1726 = vpop.f32.mrf.mxu0
      %v1727 = vadd.f32 0.0, %v1726
      %1728 = vmatmul.f32.gmra.mxu0 %v1707
      %v1729 = vpop.f32.mrf.mxu0
      %v1730 = vadd.f32 0.0, %v1729
      %1731 = vdwg.mxu0
      %v1733 = vsel %vm358, %v1663, 0
      %v1736 = vsel %vm358, %v1666, 0
      %1738 = vmatpush.xpose.msra.mxu0 0.0
      %1739 = vmatpush.xpose.msra.mxu0 0.0
      %1740 = vmatpush.xpose.msra.mxu0 0.0
      %1741 = vmatpush.xpose.msra.mxu0 0.0
      %1742 = vmatpush.xpose.msra.mxu0 0.0
      %1743 = vmatpush.xpose.msra.mxu0 0.0
      %1744 = vmatpush.xpose.msra.mxu0 0.0
      %1745 = vmatpush.xpose.msra.mxu0 0.0
      %1746 = vmatpush.xpose.msra.mxu0 0.0
      %1747 = vmatpush.xpose.msra.mxu0 0.0
      %1748 = vmatpush.xpose.msra.mxu0 0.0
      %1749 = vmatpush.xpose.msra.mxu0 0.0
      %1750 = vmatpush.xpose.msra.mxu0 0.0
      %1751 = vmatpush.xpose.msra.mxu0 0.0
      %1752 = vmatpush.xpose.msra.mxu0 %v1736
      %1753 = vmatpush.xpose.msra.mxu0 %v1733
      %1754 = vmatmul.f32.gmra.mxu0 %v1733
      %v1755 = vpop.f32.mrf.mxu0
      %v1756 = vadd.f32 0.0, %v1755
      %1757 = vmatmul.f32.gmra.mxu0 %v1736
      %v1758 = vpop.f32.mrf.mxu0
      %v1759 = vadd.f32 0.0, %v1758
      %1760 = vdwg.mxu0
      %v1762 = vsel %vm358, %v1669, 0
      %v1765 = vsel %vm358, %v1672, 0
      %1767 = vmatpush.xpose.msra.mxu0 0.0
      %1768 = vmatpush.xpose.msra.mxu0 0.0
      %1769 = vmatpush.xpose.msra.mxu0 0.0
      %1770 = vmatpush.xpose.msra.mxu0 0.0
      %1771 = vmatpush.xpose.msra.mxu0 0.0
      %1772 = vmatpush.xpose.msra.mxu0 0.0
      %1773 = vmatpush.xpose.msra.mxu0 0.0
      %1774 = vmatpush.xpose.msra.mxu0 0.0
      %1775 = vmatpush.xpose.msra.mxu0 0.0
      %1776 = vmatpush.xpose.msra.mxu0 0.0
      %1777 = vmatpush.xpose.msra.mxu0 0.0
      %1778 = vmatpush.xpose.msra.mxu0 0.0
      %1779 = vmatpush.xpose.msra.mxu0 0.0
      %1780 = vmatpush.xpose.msra.mxu0 0.0
      %1781 = vmatpush.xpose.msra.mxu0 %v1765
      %1782 = vmatpush.xpose.msra.mxu0 %v1762
      %1783 = vmatmul.f32.gmra.mxu0 %v1762
      %v1784 = vpop.f32.mrf.mxu0
      %v1785 = vadd.f32 0.0, %v1784
      %1786 = vmatmul.f32.gmra.mxu0 %v1765
      %v1787 = vpop.f32.mrf.mxu0
      %v1788 = vadd.f32 0.0, %v1787
      %1789 = vdwg.mxu0
      %v1790 = vmul.f32 %v1698, 0.35355338
      %v1791 = vmul.f32 %v1701, 0.35355338
      %v1792 = vmul.f32 %v1727, 0.35355338
      %v1793 = vmul.f32 %v1730, 0.35355338
      %v1794 = vmul.f32 %v1756, 0.35355338
      %v1795 = vmul.f32 %v1759, 0.35355338
      %v1796 = vmul.f32 %v1785, 0.35355338
      %v1797 = vmul.f32 %v1788, 0.35355338
      %v1798 = vsel %vm485, %v1790, -65000.0
      %v1799 = vsel %vm486, %v1791, -65000.0
      %v1800 = vsel %vm485, %v1792, -65000.0
      %v1801 = vsel %vm486, %v1793, -65000.0
      %v1802 = vsel %vm485, %v1794, -65000.0
      %v1803 = vsel %vm486, %v1795, -65000.0
      %v1804 = vsel %vm485, %v1796, -65000.0
      %v1805 = vsel %vm486, %v1797, -65000.0
      %v1806 = vsel %vm495, %v1798, -inf
      %1807 = vmax.xlane.f32.xlu0 %v1806
      %v1808 = vpop.xlane.xlu0 %1807
      %v1809 = vsel %vm495, %v1799, -inf
      %1810 = vmax.xlane.f32.xlu0 %v1809
      %v1811 = vpop.xlane.xlu0 %1810
      %v1812 = vsel %vm495, %v1800, -inf
      %1813 = vmax.xlane.f32.xlu0 %v1812
      %v1814 = vpop.xlane.xlu0 %1813
      %v1815 = vsel %vm495, %v1801, -inf
      %1816 = vmax.xlane.f32.xlu0 %v1815
      %v1817 = vpop.xlane.xlu0 %1816
      %v1818 = vsel %vm495, %v1802, -inf
      %1819 = vmax.xlane.f32.xlu0 %v1818
      %v1820 = vpop.xlane.xlu0 %1819
      %v1821 = vsel %vm495, %v1803, -inf
      %1822 = vmax.xlane.f32.xlu0 %v1821
      %v1823 = vpop.xlane.xlu0 %1822
      %v1824 = vsel %vm495, %v1804, -inf
      %1825 = vmax.xlane.f32.xlu0 %v1824
      %v1826 = vpop.xlane.xlu0 %1825
      %v1827 = vsel %vm495, %v1805, -inf
      %1828 = vmax.xlane.f32.xlu0 %v1827
      %v1829 = vpop.xlane.xlu0 %1828
      %v1830 = vsub.f32 %v1798, %v1808
      %v1831 = vsub.f32 %v1799, %v1811
      %v1832 = vsub.f32 %v1800, %v1814
      %v1833 = vsub.f32 %v1801, %v1817
      %v1834 = vsub.f32 %v1802, %v1820
      %v1835 = vsub.f32 %v1803, %v1823
      %v1836 = vsub.f32 %v1804, %v1826
      %v1837 = vsub.f32 %v1805, %v1829
      %v1838 = vmul.f32 %v1830, 1.442695
      %v1839 = vpow.pop %v1838
      %v1840 = vmul.f32 %v1831, 1.442695
      %v1841 = vpow.pop %v1840
      %v1842 = vmul.f32 %v1832, 1.442695
      %v1843 = vpow.pop %v1842
      %v1844 = vmul.f32 %v1833, 1.442695
      %v1845 = vpow.pop %v1844
      %v1846 = vmul.f32 %v1834, 1.442695
      %v1847 = vpow.pop %v1846
      %v1848 = vmul.f32 %v1835, 1.442695
      %v1849 = vpow.pop %v1848
      %v1850 = vmul.f32 %v1836, 1.442695
      %v1851 = vpow.pop %v1850
      %v1852 = vmul.f32 %v1837, 1.442695
      %v1853 = vpow.pop %v1852
      %v1854 = vsel %vm495, %v1839, 0.0
      %1855 = vadd.xlane.f32.xlu0 %v1854
      %v1856 = vpop.xlane.xlu0 %1855
      %v1857 = vsel %vm495, %v1841, 0.0
      %1858 = vadd.xlane.f32.xlu0 %v1857
      %v1859 = vpop.xlane.xlu0 %1858
      %v1860 = vsel %vm495, %v1843, 0.0
      %1861 = vadd.xlane.f32.xlu0 %v1860
      %v1862 = vpop.xlane.xlu0 %1861
      %v1863 = vsel %vm495, %v1845, 0.0
      %1864 = vadd.xlane.f32.xlu0 %v1863
      %v1865 = vpop.xlane.xlu0 %1864
      %v1866 = vsel %vm495, %v1847, 0.0
      %1867 = vadd.xlane.f32.xlu0 %v1866
      %v1868 = vpop.xlane.xlu0 %1867
      %v1869 = vsel %vm495, %v1849, 0.0
      %1870 = vadd.xlane.f32.xlu0 %v1869
      %v1871 = vpop.xlane.xlu0 %1870
      %v1872 = vsel %vm495, %v1851, 0.0
      %1873 = vadd.xlane.f32.xlu0 %v1872
      %v1874 = vpop.xlane.xlu0 %1873
      %v1875 = vsel %vm495, %v1853, 0.0
      %1876 = vadd.xlane.f32.xlu0 %v1875
      %v1877 = vpop.xlane.xlu0 %1876
      %v1878 = vrcp.pop %v1856
      %v1879 = vrcp.pop %v1859
      %v1880 = vrcp.pop %v1862
      %v1881 = vrcp.pop %v1865
      %v1882 = vrcp.pop %v1868
      %v1883 = vrcp.pop %v1871
      %v1884 = vrcp.pop %v1874
      %v1885 = vrcp.pop %v1877
      %v1886 = vmul.f32 %v1839, %v1878
      %v1887 = vmul.f32 %v1841, %v1879
      %v1888 = vmul.f32 %v1843, %v1880
      %v1889 = vmul.f32 %v1845, %v1881
      %v1890 = vmul.f32 %v1847, %v1882
      %v1891 = vmul.f32 %v1849, %v1883
      %v1892 = vmul.f32 %v1851, %v1884
      %v1893 = vmul.f32 %v1853, %v1885
      %v1895 = vsel %vm495, %v1886, 0
      %v1898 = vsel %vm495, %v1887, 0
      %1900 = vmatpush.msra.mxu0 0.0
      %1901 = vmatpush.msra.mxu0 0.0
      %1902 = vmatpush.msra.mxu0 0.0
      %1903 = vmatpush.msra.mxu0 0.0
      %1904 = vmatpush.msra.mxu0 0.0
      %1905 = vmatpush.msra.mxu0 0.0
      %1906 = vmatpush.msra.mxu0 0.0
      %1907 = vmatpush.msra.mxu0 0.0
      %1908 = vmatpush.msra.mxu0 0.0
      %1909 = vmatpush.msra.mxu0 0.0
      %1910 = vmatpush.msra.mxu0 0.0
      %1911 = vmatpush.msra.mxu0 0.0
      %1912 = vmatpush.msra.mxu0 0.0
      %1913 = vmatpush.msra.mxu0 0.0
      %1914 = vmatpush.msra.mxu0 %v1654
      %1915 = vmatpush.msra.mxu0 %v1651
      %1916 = vmatmul.f32.gmra.mxu0 %v1895
      %v1917 = vpop.f32.mrf.mxu0
      %v1918 = vadd.f32 0.0, %v1917
      %1919 = vmatmul.f32.gmra.mxu0 %v1898
      %v1920 = vpop.f32.mrf.mxu0
      %v1921 = vadd.f32 0.0, %v1920
      %1922 = vdwg.mxu0
      %v1924 = vsel %vm495, %v1888, 0
      %v1927 = vsel %vm495, %v1889, 0
      %1929 = vmatpush.msra.mxu0 0.0
      %1930 = vmatpush.msra.mxu0 0.0
      %1931 = vmatpush.msra.mxu0 0.0
      %1932 = vmatpush.msra.mxu0 0.0
      %1933 = vmatpush.msra.mxu0 0.0
      %1934 = vmatpush.msra.mxu0 0.0
      %1935 = vmatpush.msra.mxu0 0.0
      %1936 = vmatpush.msra.mxu0 0.0
      %1937 = vmatpush.msra.mxu0 0.0
      %1938 = vmatpush.msra.mxu0 0.0
      %1939 = vmatpush.msra.mxu0 0.0
      %1940 = vmatpush.msra.mxu0 0.0
      %1941 = vmatpush.msra.mxu0 0.0
      %1942 = vmatpush.msra.mxu0 0.0
      %1943 = vmatpush.msra.mxu0 %v1660
      %1944 = vmatpush.msra.mxu0 %v1657
      %1945 = vmatmul.f32.gmra.mxu0 %v1924
      %v1946 = vpop.f32.mrf.mxu0
      %v1947 = vadd.f32 0.0, %v1946
      %1948 = vmatmul.f32.gmra.mxu0 %v1927
      %v1949 = vpop.f32.mrf.mxu0
      %v1950 = vadd.f32 0.0, %v1949
      %1951 = vdwg.mxu0
      %v1953 = vsel %vm495, %v1890, 0
      %v1956 = vsel %vm495, %v1891, 0
      %1958 = vmatpush.msra.mxu0 0.0
      %1959 = vmatpush.msra.mxu0 0.0
      %1960 = vmatpush.msra.mxu0 0.0
      %1961 = vmatpush.msra.mxu0 0.0
      %1962 = vmatpush.msra.mxu0 0.0
      %1963 = vmatpush.msra.mxu0 0.0
      %1964 = vmatpush.msra.mxu0 0.0
      %1965 = vmatpush.msra.mxu0 0.0
      %1966 = vmatpush.msra.mxu0 0.0
      %1967 = vmatpush.msra.mxu0 0.0
      %1968 = vmatpush.msra.mxu0 0.0
      %1969 = vmatpush.msra.mxu0 0.0
      %1970 = vmatpush.msra.mxu0 0.0
      %1971 = vmatpush.msra.mxu0 0.0
      %1972 = vmatpush.msra.mxu0 %v1666
      %1973 = vmatpush.msra.mxu0 %v1663
      %1974 = vmatmul.f32.gmra.mxu0 %v1953
      %v1975 = vpop.f32.mrf.mxu0
      %v1976 = vadd.f32 0.0, %v1975
      %1977 = vmatmul.f32.gmra.mxu0 %v1956
      %v1978 = vpop.f32.mrf.mxu0
      %v1979 = vadd.f32 0.0, %v1978
      %1980 = vdwg.mxu0
      %v1982 = vsel %vm495, %v1892, 0
      %v1985 = vsel %vm495, %v1893, 0
      %1987 = vmatpush.msra.mxu0 0.0
      %1988 = vmatpush.msra.mxu0 0.0
      %1989 = vmatpush.msra.mxu0 0.0
      %1990 = vmatpush.msra.mxu0 0.0
      %1991 = vmatpush.msra.mxu0 0.0
      %1992 = vmatpush.msra.mxu0 0.0
      %1993 = vmatpush.msra.mxu0 0.0
      %1994 = vmatpush.msra.mxu0 0.0
      %1995 = vmatpush.msra.mxu0 0.0
      %1996 = vmatpush.msra.mxu0 0.0
      %1997 = vmatpush.msra.mxu0 0.0
      %1998 = vmatpush.msra.mxu0 0.0
      %1999 = vmatpush.msra.mxu0 0.0
      %2000 = vmatpush.msra.mxu0 0.0
      %2001 = vmatpush.msra.mxu0 %v1672
      %2002 = vmatpush.msra.mxu0 %v1669
      %2003 = vmatmul.f32.gmra.mxu0 %v1982
      %v2004 = vpop.f32.mrf.mxu0
      %v2005 = vadd.f32 0.0, %v2004
      %2006 = vmatmul.f32.gmra.mxu0 %v1985
      %v2007 = vpop.f32.mrf.mxu0
      %v2008 = vadd.f32 0.0, %v2007
      %2009 = vdwg.mxu0
      %v2010 = vsel %vm358, %v1918, 0.0
      %v2011 = vsel %vm358, %v1947, 0.0
      %v2012 = vadd.f32 %v2010, %v2011
      %v2013 = vsel %vm358, %v1976, 0.0
      %v2014 = vadd.f32 %v2012, %v2013
      %v2015 = vsel %vm358, %v2005, 0.0
      %v2016 = vadd.f32 %v2014, %v2015
      %v2017 = vsel %vm358, %v1921, 0.0
      %v2018 = vsel %vm358, %v1950, 0.0
      %v2019 = vadd.f32 %v2017, %v2018
      %v2020 = vsel %vm358, %v1979, 0.0
      %v2021 = vadd.f32 %v2019, %v2020
      %v2022 = vsel %vm358, %v2008, 0.0
      %v2023 = vadd.f32 %v2021, %v2022
      %v2024 = vmul.f32 %v2016, %v720
      %v2025 = vmul.f32 %v2023, %v720
      %s2026 = scalar_lea.vmem %s4, 24
      %v2027 = vld [vmem:[%s2026] sm:$0xff]
      %v2029 = vsel %vm358, %v2024, 0
      %v2032 = vsel %vm358, %v2025, 0
      %2034 = vmatpush.msra.mxu0 0.0
      %2035 = vmatpush.msra.mxu0 0.0
      %2036 = vmatpush.msra.mxu0 0.0
      %2037 = vmatpush.msra.mxu0 0.0
      %2038 = vmatpush.msra.mxu0 0.0
      %2039 = vmatpush.msra.mxu0 0.0
      %2040 = vmatpush.msra.mxu0 0.0
      %2041 = vmatpush.msra.mxu0 0.0
      %2042 = vmatpush.msra.mxu0 0.0
      %2043 = vmatpush.msra.mxu0 0.0
      %2044 = vmatpush.msra.mxu0 0.0
      %2045 = vmatpush.msra.mxu0 0.0
      %2046 = vmatpush.msra.mxu0 0.0
      %2047 = vmatpush.msra.mxu0 0.0
      %2048 = vmatpush.msra.mxu0 0.0
      %2049 = vmatpush.msra.mxu0 %v2027
      %2050 = vmatmul.f32.gmra.mxu0 %v2029
      %v2051 = vpop.f32.mrf.mxu0
      %v2052 = vadd.f32 0.0, %v2051
      %2053 = vmatmul.f32.gmra.mxu0 %v2032
      %v2054 = vpop.f32.mrf.mxu0
      %v2055 = vadd.f32 0.0, %v2054
      %2056 = vdwg.mxu0
      %v2057 = vadd.f32 %v1621, %v2052
      %v2058 = vadd.f32 %v1622, %v2055
      %v2059 = vld [vmem:[%s5] sm:$0x1]
      %v2061 = vperm.slane %v2059, 0
      %v2063 = vadd.f32 %v2057, %v2061
      %v2064 = vadd.f32 %v2058, %v2061
      %2067 = vrot.lane.b32.xlu0 %v2063, 32
      %v2068 = vpop.permute.xlu0 %2067
      %2069 = vrot.lane.b32.xlu0 %v2064, 32
      %v2070 = vpop.permute.xlu0 %2069
      %2073 = vrot.lane.b32.xlu0 %v2063, 64
      %v2074 = vpop.permute.xlu0 %2073
      %2075 = vrot.lane.b32.xlu0 %v2064, 64
      %v2076 = vpop.permute.xlu0 %2075
      %2079 = vrot.lane.b32.xlu0 %v2063, 96
      %v2080 = vpop.permute.xlu0 %2079
      %2081 = vrot.lane.b32.xlu0 %v2064, 96
      %v2082 = vpop.permute.xlu0 %2081
      %v2085 = vsel %vm292, %v2063, %v2068
      %v2086 = vsel %vm292, %v2064, %v2070
      %vm2087 = vcmask 523264
      %v2088 = vsel %vm2087, %v2085, %v2074
      %v2089 = vsel %vm2087, %v2086, %v2076
      %vm2090 = vcmask 785408
      %v2091 = vsel %vm2090, %v2088, %v2080
      %v2092 = vsel %vm2090, %v2089, %v2082
      %2093 = vst [vmem:[%s271] sm:$0xff] %v2091
      %2094 = vst [vmem:[%s271 + $0x8] sm:$0xff] %v2091
      %2095 = vst [vmem:[%s271 + $0x10] sm:$0xff] %v2091
      %2096 = vst [vmem:[%s271 + $0x18] sm:$0xff] %v2091
      %2097 = vst [vmem:[%s271 + $0x20] sm:$0xff] %v2092
      %2098 = vst [vmem:[%s271 + $0x28] sm:$0xff] %v2092
      %2099 = vst [vmem:[%s271 + $0x30] sm:$0xff] %v2092
      %2100 = vst [vmem:[%s271 + $0x38] sm:$0xff] %v2092
      %p2101 = scmp.lt.s32.totalorder %s17, 1
      %s2102 = scalar_select %p2101, %s17, 1
      %s2103 = smul.addr %s2102, 8
      %s2104 = smul.addr %s2103, 8
      %s2105 = scalar_lea.vmem %s6, %s2104
      // Predicated region
      $region45: #{msa_pair_attention_forward.1} parent=43 // pred_check
        %p2106 = pneg %p171
      $region46: #{msa_pair_attention_forward.1} parent=43 // pred_check_branch
        %2108 = sbr.rel (%p2106) target = $region48
      $region47: #{msa_pair_attention_forward.1} parent=43 // pred_region
        _
      $region48: #{msa_pair_attention_forward.1} parent=43 // pred_fallthru
        _
    $region44: #{msa_pair_attention_forward.1} parent=5 // pred_fallthru
      _
    %p2109 = scmp.le.s32.totalorder 2, %s12
    // Predicated region
    $region49: #{msa_pair_attention_forward.1} parent=5 // pred_check
      %p2110 = pneg %p2109
    $region50: #{msa_pair_attention_forward.1} parent=5 // pred_check_branch
      %2112 = sbr.rel (%p2110) target = $region52
    $region51: #{msa_pair_attention_forward.1} parent=5 // pred_region
      %s2113 = ssub.s32 %s12, 2
      // Predicated region
      $region53: #{msa_pair_attention_forward.1} parent=51 // pred_check
        %p2114 = pneg %p177
      $region54: #{msa_pair_attention_forward.1} parent=51 // pred_check_branch
        %2116 = sbr.rel (%p2114) target = $region56
      $region55: #{msa_pair_attention_forward.1} parent=51 // pred_region
        %p2117 = scmp.lt.s32.totalorder %s18, 1
        %s2118 = scalar_select %p2117, %s18, 1
        %s2119 = smul.addr %s2118, 8
        %s2120 = smul.addr %s2119, 8
        %s2121 = scalar_lea.vmem %s6, %s2120
      $region56: #{msa_pair_attention_forward.1} parent=51 // pred_fallthru
        _
    $region52: #{msa_pair_attention_forward.1} parent=5 // pred_fallthru
      _
  $region6: #{msa_pair_attention_forward.1} parent=0 // loop_footer
    %s16 = sadd.s32 1, %s12
  $region7: #{msa_pair_attention_forward.1} parent=0 // loop_footer_branch
    %11 = sbr.rel target = $region3
  $region8: #{msa_pair_attention_forward.1} parent=0 // loop_exit
    _

</llo_original>
